<compile_context>
chip_gen: v6e
topology: v6e:2x2x1
jax: 0.10.0
libtpu: 0.0.40
codegen_flags: <defaults>
</compile_context>

<pallas_src>
import jax
import jax.numpy as jnp
from jax import lax
from jax.experimental import pallas as pl
from jax.experimental.pallas import tpu as pltpu


def edgeconv_kernel(x_ref, ii_ref, jj_ref, wa_ref, wb_ref, b_ref, o_ref):
    # x_ref : (1, C, N)       vertex features for this batch (channels on sublanes)
    # ii_ref: (1, K, TN) i32  center indices   (edge_index[1]) for this vertex tile
    # jj_ref: (1, K, TN) i32  neighbor indices (edge_index[0]) for this vertex tile
    # wa_ref: (Cout, C)  = W1 - W2       wb_ref: (Cout, C) = W2
    # b_ref : (Cout, 1)
    # o_ref : (1, Cout, TN)   lane-dense over vertices, matches final NCHW layout
    x = x_ref[0]                                                     # (C, N)
    p = jnp.dot(wa_ref[...], x, preferred_element_type=jnp.float32)  # (Cout, N)
    q = jnp.dot(wb_ref[...], x, preferred_element_type=jnp.float32)  # (Cout, N)
    bias = b_ref[...]                                                # (Cout, 1)

    n_full = x.shape[-1]
    tn = o_ref.shape[-1]
    k_total = ii_ref.shape[1]

    # row_ids[m, t] = m  (vertex id along the contraction axis of the gather matmul)
    row_ids = lax.broadcasted_iota(jnp.int32, (n_full, tn), 0)       # (N, TN)

    acc = None
    for k in range(k_total):          # K is small & static -> fully unrolled
        ii = ii_ref[0, k : k + 1, :]  # (1, TN) int32
        jj = jj_ref[0, k : k + 1, :]
        # One-hot selection matrices (gather-as-matmul; MXU-friendly, always lowers).
        oh_i = jnp.where(row_ids == ii, jnp.float32(1.0), jnp.float32(0.0))  # (N, TN)
        oh_j = jnp.where(row_ids == jj, jnp.float32(1.0), jnp.float32(0.0))  # (N, TN)
        # y[:, t] = P[:, ii_k[t]] + Q[:, jj_k[t]] + b
        y = (jnp.dot(p, oh_i, preferred_element_type=jnp.float32)
             + jnp.dot(q, oh_j, preferred_element_type=jnp.float32)
             + bias)                                                 # (Cout, TN)
        y = jnp.maximum(y, 0.0)                                      # ReLU (per edge)
        acc = y if acc is None else jnp.maximum(acc, y)              # running max over K
    o_ref[0] = acc.astype(o_ref.dtype)


def edgeconv2d_pallas(x_nchw, edge_index, W, bias, *, tn=None):
    """x_nchw: (B, C, N, 1); edge_index: (2, B, N, K) int; W: (Cout, 2C); bias: (Cout,)."""
    B, C, N, _ = x_nchw.shape
    K = edge_index.shape[-1]
    Cout = W.shape[0]

    # Kernel-friendly layouts (no feature-tensor transposes; only the tiny int index
    # tensors are transposed so the vertex axis lands on lanes).
    x_cn = x_nchw[..., 0]                                            # (B, C, N)
    idx_i = jnp.transpose(edge_index[1], (0, 2, 1)).astype(jnp.int32)  # (B, K, N) centers
    idx_j = jnp.transpose(edge_index[0], (0, 2, 1)).astype(jnp.int32)  # (B, K, N) neighbors

    # Split the conv weight: conv([x_i ; x_j - x_i]) == (W1 - W2) x_i + W2 x_j + b
    w1 = W[:, :C]
    w2 = W[:, C:]
    wa = w1 - w2                                                     # (Cout, C), hits x_i
    wb = w2                                                          # (Cout, C), hits x_j
    b2 = bias.reshape(Cout, 1)

    # Tile the vertex axis so per-step blocks stay VMEM-bounded and the grid has
    # something to shard across TensorCores.
    if tn is None:
        tn = N
        for cand in (512, 256, 128):
            if N % cand == 0:
                tn = cand
                break
    num_tiles = N // tn

    out_cn = pl.pallas_call(
        edgeconv_kernel,
        out_shape=jax.ShapeDtypeStruct((B, Cout, N), x_nchw.dtype),
        grid=(B, num_tiles),
        in_specs=[
            pl.BlockSpec((1, C, N), lambda b, t: (b, 0, 0)),      # full x for batch b
            pl.BlockSpec((1, K, tn), lambda b, t: (b, 0, t)),     # center idx tile
            pl.BlockSpec((1, K, tn), lambda b, t: (b, 0, t)),     # neighbor idx tile
            pl.BlockSpec((Cout, C), lambda b, t: (0, 0)),         # W1 - W2 (resident)
            pl.BlockSpec((Cout, C), lambda b, t: (0, 0)),         # W2      (resident)
            pl.BlockSpec((Cout, 1), lambda b, t: (0, 0)),         # bias
        ],
        out_specs=pl.BlockSpec((1, Cout, tn), lambda b, t: (b, 0, t)),
        compiler_params=pltpu.CompilerParams(
            dimension_semantics=("parallel", "parallel"),
            vmem_limit_bytes=32 * 1024 * 1024,
        ),
    )(x_cn, idx_i, idx_j, wa, wb, b2)

    # (B, Cout, N) -> (B, Cout, N, 1)  (already channel-major; no transpose needed)
    return out_cn[..., None]


def edgeconv2d_ref(x_nchw, edge_index, W, bias):
    """Pure-JAX reference matching the PyTorch EdgeConv2d.forward exactly."""
    x = x_nchw[..., 0]                                       # (B, C, N)
    gather = jax.vmap(lambda xb, ib: xb[:, ib])              # (C,N),(N,K) -> (C,N,K)
    x_i = gather(x, edge_index[1])                           # (B, C, N, K)
    x_j = gather(x, edge_index[0])                           # (B, C, N, K)
    feat = jnp.concatenate([x_i, x_j - x_i], axis=1)         # (B, 2C, N, K)
    y = jnp.einsum('bcnk,oc->bonk', feat, W) + bias[None, :, None, None]
    y = jnp.maximum(y, 0.0)                                  # ReLU
    return jnp.max(y, axis=-1, keepdims=True)                # (B, Cout, N, 1)


if __name__ == "__main__":
    B, C, N, K = 2, 4, 16, 8
    Cout = 8

    key = jax.random.PRNGKey(0)
    kx, ki, kj, kw, kb = jax.random.split(key, 5)

    x = jax.random.normal(kx, (B, C, N, 1), dtype=jnp.float32)
    edge_index = jnp.stack(
        [
            jax.random.randint(kj, (B, N, K), 0, N, dtype=jnp.int32),  # edge_index[0] = neighbors
            jax.random.randint(ki, (B, N, K), 0, N, dtype=jnp.int32),  # edge_index[1] = centers
        ],
        axis=0,
    )  # (2, B, N, K)

    # Deterministic synthetic parameters for Conv2d(2C, Cout, 1, bias=True)
    W = 0.1 * jax.random.normal(kw, (Cout, 2 * C), dtype=jnp.float32)
    bias = 0.1 * jax.random.normal(kb, (Cout,), dtype=jnp.float32)

    out = edgeconv2d_pallas(x, edge_index, W, bias)
    out = jax.block_until_ready(out)

    ref = edgeconv2d_ref(x, edge_index, W, bias)
    assert out.shape == (B, Cout, N, 1), out.shape
    assert jnp.allclose(out, ref, atol=1e-5, rtol=1e-5), float(jnp.max(jnp.abs(out - ref)))

    print("KERNEL_OK")
</pallas_src>

<mosaic_0001>
module attributes {stable_mosaic.version = 11 : i64} {
  func.func @edgeconv_kernel(%arg0: i32, %arg1: i32, %arg2: memref<1x4x16xf32, #tpu.memory_space<vmem>>, %arg3: memref<1x8x16xi32, #tpu.memory_space<vmem>>, %arg4: memref<1x8x16xi32, #tpu.memory_space<vmem>>, %arg5: memref<8x4xf32, #tpu.memory_space<vmem>>, %arg6: memref<8x4xf32, #tpu.memory_space<vmem>>, %arg7: memref<8x1xf32, #tpu.memory_space<vmem>>, %arg8: memref<1x8x16xf32, #tpu.memory_space<vmem>>) attributes {dimension_semantics = [#tpu.dimension_semantics<parallel>, #tpu.dimension_semantics<parallel>], iteration_bounds = array<i64: 2, 1>, scalar_prefetch = 0 : i64, scratch_operands = 0 : i64, tpu.core_type = #tpu.core_type<tc>, window_params = [{transform_indices = @transform_0, window_bounds = array<i64: 1, 4, 16>}, {transform_indices = @transform_1, window_bounds = array<i64: 1, 8, 16>}, {transform_indices = @transform_2, window_bounds = array<i64: 1, 8, 16>}, {pipeline_mode = #tpu.pipeline_mode<synchronous>, transform_indices = @transform_3, window_bounds = array<i64: 8, 4>}, {pipeline_mode = #tpu.pipeline_mode<synchronous>, transform_indices = @transform_4, window_bounds = array<i64: 8, 4>}, {pipeline_mode = #tpu.pipeline_mode<synchronous>, transform_indices = @transform_5, window_bounds = array<i64: 8, 1>}, {transform_indices = @transform_6, window_bounds = array<i64: 1, 8, 16>}]} {
    %c0 = arith.constant 0 : index
    %c0_0 = arith.constant 0 : index
    %c0_1 = arith.constant 0 : index
    %0 = vector.load %arg2[%c0, %c0_0, %c0_1] : memref<1x4x16xf32, #tpu.memory_space<vmem>>, vector<1x4x16xf32>
    %1 = vector.shape_cast %0 : vector<1x4x16xf32> to vector<4x16xf32>
    %c0_2 = arith.constant 0 : index
    %c0_3 = arith.constant 0 : index
    %2 = vector.load %arg5[%c0_2, %c0_3] : memref<8x4xf32, #tpu.memory_space<vmem>>, vector<8x4xf32>
    %cst = arith.constant dense<0.000000e+00> : vector<8x16xf32>
    %3 = tpu.matmul %2, %1, %cst {dimension_numbers = #tpu.dot_dimension_numbers<[1], [0], [0], [1], [0, 0, 1, 1], [], []>} : vector<8x4xf32>, vector<4x16xf32>, vector<8x16xf32> -> vector<8x16xf32>
    %c0_4 = arith.constant 0 : index
    %c0_5 = arith.constant 0 : index
    %4 = vector.load %arg6[%c0_4, %c0_5] : memref<8x4xf32, #tpu.memory_space<vmem>>, vector<8x4xf32>
    %cst_6 = arith.constant dense<0.000000e+00> : vector<8x16xf32>
    %5 = tpu.matmul %4, %1, %cst_6 {dimension_numbers = #tpu.dot_dimension_numbers<[1], [0], [0], [1], [0, 0, 1, 1], [], []>} : vector<8x4xf32>, vector<4x16xf32>, vector<8x16xf32> -> vector<8x16xf32>
    %c0_7 = arith.constant 0 : index
    %c0_8 = arith.constant 0 : index
    %6 = vector.load %arg7[%c0_7, %c0_8] : memref<8x1xf32, #tpu.memory_space<vmem>>, vector<8x1xf32>
    %7 = tpu.iota {dimensions = array<i32: 0>} : vector<16x16xi32>
    %c0_9 = arith.constant 0 : index
    %c0_10 = arith.constant 0 : index
    %c0_11 = arith.constant 0 : index
    %8 = vector.load %arg3[%c0_9, %c0_10, %c0_11] : memref<1x8x16xi32, #tpu.memory_space<vmem>>, vector<1x1x16xi32>
    %9 = vector.shape_cast %8 : vector<1x1x16xi32> to vector<1x16xi32>
    %c0_12 = arith.constant 0 : index
    %c0_13 = arith.constant 0 : index
    %c0_14 = arith.constant 0 : index
    %10 = vector.load %arg4[%c0_12, %c0_13, %c0_14] : memref<1x8x16xi32, #tpu.memory_space<vmem>>, vector<1x1x16xi32>
    %11 = vector.shape_cast %10 : vector<1x1x16xi32> to vector<1x16xi32>
    %12 = vector.broadcast %9 : vector<1x16xi32> to vector<16x16xi32>
    %13 = arith.cmpi eq, %7, %12 : vector<16x16xi32>
    %cst_15 = arith.constant 1.000000e+00 : f32
    %cst_16 = arith.constant 0.000000e+00 : f32
    %14 = vector.broadcast %cst_15 : f32 to vector<16x16xf32>
    %15 = vector.broadcast %cst_16 : f32 to vector<16x16xf32>
    %16 = arith.select %13, %14, %15 : vector<16x16xi1>, vector<16x16xf32>
    %17 = vector.broadcast %11 : vector<1x16xi32> to vector<16x16xi32>
    %18 = arith.cmpi eq, %7, %17 : vector<16x16xi32>
    %cst_17 = arith.constant 1.000000e+00 : f32
    %cst_18 = arith.constant 0.000000e+00 : f32
    %19 = vector.broadcast %cst_17 : f32 to vector<16x16xf32>
    %20 = vector.broadcast %cst_18 : f32 to vector<16x16xf32>
    %21 = arith.select %18, %19, %20 : vector<16x16xi1>, vector<16x16xf32>
    %cst_19 = arith.constant dense<0.000000e+00> : vector<8x16xf32>
    %22 = tpu.matmul %3, %16, %cst_19 {dimension_numbers = #tpu.dot_dimension_numbers<[1], [0], [0], [1], [0, 0, 1, 1], [], []>} : vector<8x16xf32>, vector<16x16xf32>, vector<8x16xf32> -> vector<8x16xf32>
    %cst_20 = arith.constant dense<0.000000e+00> : vector<8x16xf32>
    %23 = tpu.matmul %5, %21, %cst_20 {dimension_numbers = #tpu.dot_dimension_numbers<[1], [0], [0], [1], [0, 0, 1, 1], [], []>} : vector<8x16xf32>, vector<16x16xf32>, vector<8x16xf32> -> vector<8x16xf32>
    %24 = arith.addf %22, %23 : vector<8x16xf32>
    %25 = vector.broadcast %6 : vector<8x1xf32> to vector<8x16xf32>
    %26 = arith.addf %24, %25 : vector<8x16xf32>
    %cst_21 = arith.constant 0.000000e+00 : f32
    %27 = vector.broadcast %cst_21 : f32 to vector<8x16xf32>
    %28 = arith.maximumf %26, %27 : vector<8x16xf32>
    %c0_22 = arith.constant 0 : index
    %c1 = arith.constant 1 : index
    %c0_23 = arith.constant 0 : index
    %29 = vector.load %arg3[%c0_22, %c1, %c0_23] : memref<1x8x16xi32, #tpu.memory_space<vmem>>, vector<1x1x16xi32>
    %30 = vector.shape_cast %29 : vector<1x1x16xi32> to vector<1x16xi32>
    %c0_24 = arith.constant 0 : index
    %c1_25 = arith.constant 1 : index
    %c0_26 = arith.constant 0 : index
    %31 = vector.load %arg4[%c0_24, %c1_25, %c0_26] : memref<1x8x16xi32, #tpu.memory_space<vmem>>, vector<1x1x16xi32>
    %32 = vector.shape_cast %31 : vector<1x1x16xi32> to vector<1x16xi32>
    %33 = vector.broadcast %30 : vector<1x16xi32> to vector<16x16xi32>
    %34 = arith.cmpi eq, %7, %33 : vector<16x16xi32>
    %cst_27 = arith.constant 1.000000e+00 : f32
    %cst_28 = arith.constant 0.000000e+00 : f32
    %35 = vector.broadcast %cst_27 : f32 to vector<16x16xf32>
    %36 = vector.broadcast %cst_28 : f32 to vector<16x16xf32>
    %37 = arith.select %34, %35, %36 : vector<16x16xi1>, vector<16x16xf32>
    %38 = vector.broadcast %32 : vector<1x16xi32> to vector<16x16xi32>
    %39 = arith.cmpi eq, %7, %38 : vector<16x16xi32>
    %cst_29 = arith.constant 1.000000e+00 : f32
    %cst_30 = arith.constant 0.000000e+00 : f32
    %40 = vector.broadcast %cst_29 : f32 to vector<16x16xf32>
    %41 = vector.broadcast %cst_30 : f32 to vector<16x16xf32>
    %42 = arith.select %39, %40, %41 : vector<16x16xi1>, vector<16x16xf32>
    %cst_31 = arith.constant dense<0.000000e+00> : vector<8x16xf32>
    %43 = tpu.matmul %3, %37, %cst_31 {dimension_numbers = #tpu.dot_dimension_numbers<[1], [0], [0], [1], [0, 0, 1, 1], [], []>} : vector<8x16xf32>, vector<16x16xf32>, vector<8x16xf32> -> vector<8x16xf32>
    %cst_32 = arith.constant dense<0.000000e+00> : vector<8x16xf32>
    %44 = tpu.matmul %5, %42, %cst_32 {dimension_numbers = #tpu.dot_dimension_numbers<[1], [0], [0], [1], [0, 0, 1, 1], [], []>} : vector<8x16xf32>, vector<16x16xf32>, vector<8x16xf32> -> vector<8x16xf32>
    %45 = arith.addf %43, %44 : vector<8x16xf32>
    %46 = vector.broadcast %6 : vector<8x1xf32> to vector<8x16xf32>
    %47 = arith.addf %45, %46 : vector<8x16xf32>
    %cst_33 = arith.constant 0.000000e+00 : f32
    %48 = vector.broadcast %cst_33 : f32 to vector<8x16xf32>
    %49 = arith.maximumf %47, %48 : vector<8x16xf32>
    %50 = arith.maximumf %28, %49 : vector<8x16xf32>
    %c0_34 = arith.constant 0 : index
    %c2 = arith.constant 2 : index
    %c0_35 = arith.constant 0 : index
    %51 = vector.load %arg3[%c0_34, %c2, %c0_35] : memref<1x8x16xi32, #tpu.memory_space<vmem>>, vector<1x1x16xi32>
    %52 = vector.shape_cast %51 : vector<1x1x16xi32> to vector<1x16xi32>
    %c0_36 = arith.constant 0 : index
    %c2_37 = arith.constant 2 : index
    %c0_38 = arith.constant 0 : index
    %53 = vector.load %arg4[%c0_36, %c2_37, %c0_38] : memref<1x8x16xi32, #tpu.memory_space<vmem>>, vector<1x1x16xi32>
    %54 = vector.shape_cast %53 : vector<1x1x16xi32> to vector<1x16xi32>
    %55 = vector.broadcast %52 : vector<1x16xi32> to vector<16x16xi32>
    %56 = arith.cmpi eq, %7, %55 : vector<16x16xi32>
    %cst_39 = arith.constant 1.000000e+00 : f32
    %cst_40 = arith.constant 0.000000e+00 : f32
    %57 = vector.broadcast %cst_39 : f32 to vector<16x16xf32>
    %58 = vector.broadcast %cst_40 : f32 to vector<16x16xf32>
    %59 = arith.select %56, %57, %58 : vector<16x16xi1>, vector<16x16xf32>
    %60 = vector.broadcast %54 : vector<1x16xi32> to vector<16x16xi32>
    %61 = arith.cmpi eq, %7, %60 : vector<16x16xi32>
    %cst_41 = arith.constant 1.000000e+00 : f32
    %cst_42 = arith.constant 0.000000e+00 : f32
    %62 = vector.broadcast %cst_41 : f32 to vector<16x16xf32>
    %63 = vector.broadcast %cst_42 : f32 to vector<16x16xf32>
    %64 = arith.select %61, %62, %63 : vector<16x16xi1>, vector<16x16xf32>
    %cst_43 = arith.constant dense<0.000000e+00> : vector<8x16xf32>
    %65 = tpu.matmul %3, %59, %cst_43 {dimension_numbers = #tpu.dot_dimension_numbers<[1], [0], [0], [1], [0, 0, 1, 1], [], []>} : vector<8x16xf32>, vector<16x16xf32>, vector<8x16xf32> -> vector<8x16xf32>
    %cst_44 = arith.constant dense<0.000000e+00> : vector<8x16xf32>
    %66 = tpu.matmul %5, %64, %cst_44 {dimension_numbers = #tpu.dot_dimension_numbers<[1], [0], [0], [1], [0, 0, 1, 1], [], []>} : vector<8x16xf32>, vector<16x16xf32>, vector<8x16xf32> -> vector<8x16xf32>
    %67 = arith.addf %65, %66 : vector<8x16xf32>
    %68 = vector.broadcast %6 : vector<8x1xf32> to vector<8x16xf32>
    %69 = arith.addf %67, %68 : vector<8x16xf32>
    %cst_45 = arith.constant 0.000000e+00 : f32
    %70 = vector.broadcast %cst_45 : f32 to vector<8x16xf32>
    %71 = arith.maximumf %69, %70 : vector<8x16xf32>
    %72 = arith.maximumf %50, %71 : vector<8x16xf32>
    %c0_46 = arith.constant 0 : index
    %c3 = arith.constant 3 : index
    %c0_47 = arith.constant 0 : index
    %73 = vector.load %arg3[%c0_46, %c3, %c0_47] : memref<1x8x16xi32, #tpu.memory_space<vmem>>, vector<1x1x16xi32>
    %74 = vector.shape_cast %73 : vector<1x1x16xi32> to vector<1x16xi32>
    %c0_48 = arith.constant 0 : index
    %c3_49 = arith.constant 3 : index
    %c0_50 = arith.constant 0 : index
    %75 = vector.load %arg4[%c0_48, %c3_49, %c0_50] : memref<1x8x16xi32, #tpu.memory_space<vmem>>, vector<1x1x16xi32>
    %76 = vector.shape_cast %75 : vector<1x1x16xi32> to vector<1x16xi32>
    %77 = vector.broadcast %74 : vector<1x16xi32> to vector<16x16xi32>
    %78 = arith.cmpi eq, %7, %77 : vector<16x16xi32>
    %cst_51 = arith.constant 1.000000e+00 : f32
    %cst_52 = arith.constant 0.000000e+00 : f32
    %79 = vector.broadcast %cst_51 : f32 to vector<16x16xf32>
    %80 = vector.broadcast %cst_52 : f32 to vector<16x16xf32>
    %81 = arith.select %78, %79, %80 : vector<16x16xi1>, vector<16x16xf32>
    %82 = vector.broadcast %76 : vector<1x16xi32> to vector<16x16xi32>
    %83 = arith.cmpi eq, %7, %82 : vector<16x16xi32>
    %cst_53 = arith.constant 1.000000e+00 : f32
    %cst_54 = arith.constant 0.000000e+00 : f32
    %84 = vector.broadcast %cst_53 : f32 to vector<16x16xf32>
    %85 = vector.broadcast %cst_54 : f32 to vector<16x16xf32>
    %86 = arith.select %83, %84, %85 : vector<16x16xi1>, vector<16x16xf32>
    %cst_55 = arith.constant dense<0.000000e+00> : vector<8x16xf32>
    %87 = tpu.matmul %3, %81, %cst_55 {dimension_numbers = #tpu.dot_dimension_numbers<[1], [0], [0], [1], [0, 0, 1, 1], [], []>} : vector<8x16xf32>, vector<16x16xf32>, vector<8x16xf32> -> vector<8x16xf32>
    %cst_56 = arith.constant dense<0.000000e+00> : vector<8x16xf32>
    %88 = tpu.matmul %5, %86, %cst_56 {dimension_numbers = #tpu.dot_dimension_numbers<[1], [0], [0], [1], [0, 0, 1, 1], [], []>} : vector<8x16xf32>, vector<16x16xf32>, vector<8x16xf32> -> vector<8x16xf32>
    %89 = arith.addf %87, %88 : vector<8x16xf32>
    %90 = vector.broadcast %6 : vector<8x1xf32> to vector<8x16xf32>
    %91 = arith.addf %89, %90 : vector<8x16xf32>
    %cst_57 = arith.constant 0.000000e+00 : f32
    %92 = vector.broadcast %cst_57 : f32 to vector<8x16xf32>
    %93 = arith.maximumf %91, %92 : vector<8x16xf32>
    %94 = arith.maximumf %72, %93 : vector<8x16xf32>
    %c0_58 = arith.constant 0 : index
    %c4 = arith.constant 4 : index
    %c0_59 = arith.constant 0 : index
    %95 = vector.load %arg3[%c0_58, %c4, %c0_59] : memref<1x8x16xi32, #tpu.memory_space<vmem>>, vector<1x1x16xi32>
    %96 = vector.shape_cast %95 : vector<1x1x16xi32> to vector<1x16xi32>
    %c0_60 = arith.constant 0 : index
    %c4_61 = arith.constant 4 : index
    %c0_62 = arith.constant 0 : index
    %97 = vector.load %arg4[%c0_60, %c4_61, %c0_62] : memref<1x8x16xi32, #tpu.memory_space<vmem>>, vector<1x1x16xi32>
    %98 = vector.shape_cast %97 : vector<1x1x16xi32> to vector<1x16xi32>
    %99 = vector.broadcast %96 : vector<1x16xi32> to vector<16x16xi32>
    %100 = arith.cmpi eq, %7, %99 : vector<16x16xi32>
    %cst_63 = arith.constant 1.000000e+00 : f32
    %cst_64 = arith.constant 0.000000e+00 : f32
    %101 = vector.broadcast %cst_63 : f32 to vector<16x16xf32>
    %102 = vector.broadcast %cst_64 : f32 to vector<16x16xf32>
    %103 = arith.select %100, %101, %102 : vector<16x16xi1>, vector<16x16xf32>
    %104 = vector.broadcast %98 : vector<1x16xi32> to vector<16x16xi32>
    %105 = arith.cmpi eq, %7, %104 : vector<16x16xi32>
    %cst_65 = arith.constant 1.000000e+00 : f32
    %cst_66 = arith.constant 0.000000e+00 : f32
    %106 = vector.broadcast %cst_65 : f32 to vector<16x16xf32>
    %107 = vector.broadcast %cst_66 : f32 to vector<16x16xf32>
    %108 = arith.select %105, %106, %107 : vector<16x16xi1>, vector<16x16xf32>
    %cst_67 = arith.constant dense<0.000000e+00> : vector<8x16xf32>
    %109 = tpu.matmul %3, %103, %cst_67 {dimension_numbers = #tpu.dot_dimension_numbers<[1], [0], [0], [1], [0, 0, 1, 1], [], []>} : vector<8x16xf32>, vector<16x16xf32>, vector<8x16xf32> -> vector<8x16xf32>
    %cst_68 = arith.constant dense<0.000000e+00> : vector<8x16xf32>
    %110 = tpu.matmul %5, %108, %cst_68 {dimension_numbers = #tpu.dot_dimension_numbers<[1], [0], [0], [1], [0, 0, 1, 1], [], []>} : vector<8x16xf32>, vector<16x16xf32>, vector<8x16xf32> -> vector<8x16xf32>
    %111 = arith.addf %109, %110 : vector<8x16xf32>
    %112 = vector.broadcast %6 : vector<8x1xf32> to vector<8x16xf32>
    %113 = arith.addf %111, %112 : vector<8x16xf32>
    %cst_69 = arith.constant 0.000000e+00 : f32
    %114 = vector.broadcast %cst_69 : f32 to vector<8x16xf32>
    %115 = arith.maximumf %113, %114 : vector<8x16xf32>
    %116 = arith.maximumf %94, %115 : vector<8x16xf32>
    %c0_70 = arith.constant 0 : index
    %c5 = arith.constant 5 : index
    %c0_71 = arith.constant 0 : index
    %117 = vector.load %arg3[%c0_70, %c5, %c0_71] : memref<1x8x16xi32, #tpu.memory_space<vmem>>, vector<1x1x16xi32>
    %118 = vector.shape_cast %117 : vector<1x1x16xi32> to vector<1x16xi32>
    %c0_72 = arith.constant 0 : index
    %c5_73 = arith.constant 5 : index
    %c0_74 = arith.constant 0 : index
    %119 = vector.load %arg4[%c0_72, %c5_73, %c0_74] : memref<1x8x16xi32, #tpu.memory_space<vmem>>, vector<1x1x16xi32>
    %120 = vector.shape_cast %119 : vector<1x1x16xi32> to vector<1x16xi32>
    %121 = vector.broadcast %118 : vector<1x16xi32> to vector<16x16xi32>
    %122 = arith.cmpi eq, %7, %121 : vector<16x16xi32>
    %cst_75 = arith.constant 1.000000e+00 : f32
    %cst_76 = arith.constant 0.000000e+00 : f32
    %123 = vector.broadcast %cst_75 : f32 to vector<16x16xf32>
    %124 = vector.broadcast %cst_76 : f32 to vector<16x16xf32>
    %125 = arith.select %122, %123, %124 : vector<16x16xi1>, vector<16x16xf32>
    %126 = vector.broadcast %120 : vector<1x16xi32> to vector<16x16xi32>
    %127 = arith.cmpi eq, %7, %126 : vector<16x16xi32>
    %cst_77 = arith.constant 1.000000e+00 : f32
    %cst_78 = arith.constant 0.000000e+00 : f32
    %128 = vector.broadcast %cst_77 : f32 to vector<16x16xf32>
    %129 = vector.broadcast %cst_78 : f32 to vector<16x16xf32>
    %130 = arith.select %127, %128, %129 : vector<16x16xi1>, vector<16x16xf32>
    %cst_79 = arith.constant dense<0.000000e+00> : vector<8x16xf32>
    %131 = tpu.matmul %3, %125, %cst_79 {dimension_numbers = #tpu.dot_dimension_numbers<[1], [0], [0], [1], [0, 0, 1, 1], [], []>} : vector<8x16xf32>, vector<16x16xf32>, vector<8x16xf32> -> vector<8x16xf32>
    %cst_80 = arith.constant dense<0.000000e+00> : vector<8x16xf32>
    %132 = tpu.matmul %5, %130, %cst_80 {dimension_numbers = #tpu.dot_dimension_numbers<[1], [0], [0], [1], [0, 0, 1, 1], [], []>} : vector<8x16xf32>, vector<16x16xf32>, vector<8x16xf32> -> vector<8x16xf32>
    %133 = arith.addf %131, %132 : vector<8x16xf32>
    %134 = vector.broadcast %6 : vector<8x1xf32> to vector<8x16xf32>
    %135 = arith.addf %133, %134 : vector<8x16xf32>
    %cst_81 = arith.constant 0.000000e+00 : f32
    %136 = vector.broadcast %cst_81 : f32 to vector<8x16xf32>
    %137 = arith.maximumf %135, %136 : vector<8x16xf32>
    %138 = arith.maximumf %116, %137 : vector<8x16xf32>
    %c0_82 = arith.constant 0 : index
    %c6 = arith.constant 6 : index
    %c0_83 = arith.constant 0 : index
    %139 = vector.load %arg3[%c0_82, %c6, %c0_83] : memref<1x8x16xi32, #tpu.memory_space<vmem>>, vector<1x1x16xi32>
    %140 = vector.shape_cast %139 : vector<1x1x16xi32> to vector<1x16xi32>
    %c0_84 = arith.constant 0 : index
    %c6_85 = arith.constant 6 : index
    %c0_86 = arith.constant 0 : index
    %141 = vector.load %arg4[%c0_84, %c6_85, %c0_86] : memref<1x8x16xi32, #tpu.memory_space<vmem>>, vector<1x1x16xi32>
    %142 = vector.shape_cast %141 : vector<1x1x16xi32> to vector<1x16xi32>
    %143 = vector.broadcast %140 : vector<1x16xi32> to vector<16x16xi32>
    %144 = arith.cmpi eq, %7, %143 : vector<16x16xi32>
    %cst_87 = arith.constant 1.000000e+00 : f32
    %cst_88 = arith.constant 0.000000e+00 : f32
    %145 = vector.broadcast %cst_87 : f32 to vector<16x16xf32>
    %146 = vector.broadcast %cst_88 : f32 to vector<16x16xf32>
    %147 = arith.select %144, %145, %146 : vector<16x16xi1>, vector<16x16xf32>
    %148 = vector.broadcast %142 : vector<1x16xi32> to vector<16x16xi32>
    %149 = arith.cmpi eq, %7, %148 : vector<16x16xi32>
    %cst_89 = arith.constant 1.000000e+00 : f32
    %cst_90 = arith.constant 0.000000e+00 : f32
    %150 = vector.broadcast %cst_89 : f32 to vector<16x16xf32>
    %151 = vector.broadcast %cst_90 : f32 to vector<16x16xf32>
    %152 = arith.select %149, %150, %151 : vector<16x16xi1>, vector<16x16xf32>
    %cst_91 = arith.constant dense<0.000000e+00> : vector<8x16xf32>
    %153 = tpu.matmul %3, %147, %cst_91 {dimension_numbers = #tpu.dot_dimension_numbers<[1], [0], [0], [1], [0, 0, 1, 1], [], []>} : vector<8x16xf32>, vector<16x16xf32>, vector<8x16xf32> -> vector<8x16xf32>
    %cst_92 = arith.constant dense<0.000000e+00> : vector<8x16xf32>
    %154 = tpu.matmul %5, %152, %cst_92 {dimension_numbers = #tpu.dot_dimension_numbers<[1], [0], [0], [1], [0, 0, 1, 1], [], []>} : vector<8x16xf32>, vector<16x16xf32>, vector<8x16xf32> -> vector<8x16xf32>
    %155 = arith.addf %153, %154 : vector<8x16xf32>
    %156 = vector.broadcast %6 : vector<8x1xf32> to vector<8x16xf32>
    %157 = arith.addf %155, %156 : vector<8x16xf32>
    %cst_93 = arith.constant 0.000000e+00 : f32
    %158 = vector.broadcast %cst_93 : f32 to vector<8x16xf32>
    %159 = arith.maximumf %157, %158 : vector<8x16xf32>
    %160 = arith.maximumf %138, %159 : vector<8x16xf32>
    %c0_94 = arith.constant 0 : index
    %c7 = arith.constant 7 : index
    %c0_95 = arith.constant 0 : index
    %161 = vector.load %arg3[%c0_94, %c7, %c0_95] : memref<1x8x16xi32, #tpu.memory_space<vmem>>, vector<1x1x16xi32>
    %162 = vector.shape_cast %161 : vector<1x1x16xi32> to vector<1x16xi32>
    %c0_96 = arith.constant 0 : index
    %c7_97 = arith.constant 7 : index
    %c0_98 = arith.constant 0 : index
    %163 = vector.load %arg4[%c0_96, %c7_97, %c0_98] : memref<1x8x16xi32, #tpu.memory_space<vmem>>, vector<1x1x16xi32>
    %164 = vector.shape_cast %163 : vector<1x1x16xi32> to vector<1x16xi32>
    %165 = vector.broadcast %162 : vector<1x16xi32> to vector<16x16xi32>
    %166 = arith.cmpi eq, %7, %165 : vector<16x16xi32>
    %cst_99 = arith.constant 1.000000e+00 : f32
    %cst_100 = arith.constant 0.000000e+00 : f32
    %167 = vector.broadcast %cst_99 : f32 to vector<16x16xf32>
    %168 = vector.broadcast %cst_100 : f32 to vector<16x16xf32>
    %169 = arith.select %166, %167, %168 : vector<16x16xi1>, vector<16x16xf32>
    %170 = vector.broadcast %164 : vector<1x16xi32> to vector<16x16xi32>
    %171 = arith.cmpi eq, %7, %170 : vector<16x16xi32>
    %cst_101 = arith.constant 1.000000e+00 : f32
    %cst_102 = arith.constant 0.000000e+00 : f32
    %172 = vector.broadcast %cst_101 : f32 to vector<16x16xf32>
    %173 = vector.broadcast %cst_102 : f32 to vector<16x16xf32>
    %174 = arith.select %171, %172, %173 : vector<16x16xi1>, vector<16x16xf32>
    %cst_103 = arith.constant dense<0.000000e+00> : vector<8x16xf32>
    %175 = tpu.matmul %3, %169, %cst_103 {dimension_numbers = #tpu.dot_dimension_numbers<[1], [0], [0], [1], [0, 0, 1, 1], [], []>} : vector<8x16xf32>, vector<16x16xf32>, vector<8x16xf32> -> vector<8x16xf32>
    %cst_104 = arith.constant dense<0.000000e+00> : vector<8x16xf32>
    %176 = tpu.matmul %5, %174, %cst_104 {dimension_numbers = #tpu.dot_dimension_numbers<[1], [0], [0], [1], [0, 0, 1, 1], [], []>} : vector<8x16xf32>, vector<16x16xf32>, vector<8x16xf32> -> vector<8x16xf32>
    %177 = arith.addf %175, %176 : vector<8x16xf32>
    %178 = vector.broadcast %6 : vector<8x1xf32> to vector<8x16xf32>
    %179 = arith.addf %177, %178 : vector<8x16xf32>
    %cst_105 = arith.constant 0.000000e+00 : f32
    %180 = vector.broadcast %cst_105 : f32 to vector<8x16xf32>
    %181 = arith.maximumf %179, %180 : vector<8x16xf32>
    %182 = arith.maximumf %160, %181 : vector<8x16xf32>
    %c0_106 = arith.constant 0 : index
    %c0_107 = arith.constant 0 : index
    %c0_108 = arith.constant 0 : index
    %183 = vector.load %arg8[%c0_106, %c0_107, %c0_108] : memref<1x8x16xf32, #tpu.memory_space<vmem>>, vector<1x8x16xf32>
    %184 = vector.shape_cast %183 : vector<1x8x16xf32> to vector<8x16xf32>
    %185 = vector.shape_cast %182 : vector<8x16xf32> to vector<1x8x16xf32>
    tpu.vector_store %arg8[%c0_106, %c0_107, %c0_108], %185 {strides = array<i32>} : memref<1x8x16xf32, #tpu.memory_space<vmem>>, vector<1x8x16xf32>,
    return
  }
  func.func @transform_0(%arg0: i32, %arg1: i32) -> (i32, i32, i32) {
    %c0_i32 = arith.constant 0 : i32
    %c0_i32_0 = arith.constant 0 : i32
    %c0_i32_1 = arith.constant 0 : i32
    return %arg0, %c0_i32, %c0_i32_0 : i32, i32, i32
  }
  func.func @transform_1(%arg0: i32, %arg1: i32) -> (i32, i32, i32) {
    %c0_i32 = arith.constant 0 : i32
    %c0_i32_0 = arith.constant 0 : i32
    return %arg0, %c0_i32, %arg1 : i32, i32, i32
  }
  func.func @transform_2(%arg0: i32, %arg1: i32) -> (i32, i32, i32) {
    %c0_i32 = arith.constant 0 : i32
    %c0_i32_0 = arith.constant 0 : i32
    return %arg0, %c0_i32, %arg1 : i32, i32, i32
  }
  func.func @transform_3(%arg0: i32, %arg1: i32) -> (i32, i32) {
    %c0_i32 = arith.constant 0 : i32
    %c0_i32_0 = arith.constant 0 : i32
    %c0_i32_1 = arith.constant 0 : i32
    return %c0_i32, %c0_i32_0 : i32, i32
  }
  func.func @transform_4(%arg0: i32, %arg1: i32) -> (i32, i32) {
    %c0_i32 = arith.constant 0 : i32
    %c0_i32_0 = arith.constant 0 : i32
    %c0_i32_1 = arith.constant 0 : i32
    return %c0_i32, %c0_i32_0 : i32, i32
  }
  func.func @transform_5(%arg0: i32, %arg1: i32) -> (i32, i32) {
    %c0_i32 = arith.constant 0 : i32
    %c0_i32_0 = arith.constant 0 : i32
    %c0_i32_1 = arith.constant 0 : i32
    return %c0_i32, %c0_i32_0 : i32, i32
  }
  func.func @transform_6(%arg0: i32, %arg1: i32) -> (i32, i32, i32) {
    %c0_i32 = arith.constant 0 : i32
    %c0_i32_0 = arith.constant 0 : i32
    return %arg0, %c0_i32, %arg1 : i32, i32, i32
  }
}

</mosaic_0001>

<llo_original>
// kernel: tpu_custom_call.1
$region0: #{tpu_custom_call.1}
  #allocation0 [shape = 'u32[]', space=smem, size = 0x4, offset = 0x4, fixed_abs, tag = 'smem constant byte address 0x4 - core index']
  #allocation1 [shape = 'u32[144,128]{1,0:T(1,128)}', space=vmem, size = 0x12000, scoped, tag = 'internal scratch']
  %s0 = inlined_call_operand.hbm [shape: f32[2,4,16], index: 0, kind: input, shape index: {}]
  %s1 = inlined_call_operand.vmem [shape: s32[2,8,16], index: 1, kind: input, shape index: {}]
  %s2 = inlined_call_operand.vmem [shape: s32[2,8,16], index: 2, kind: input, shape index: {}]
  %s3 = inlined_call_operand.vmem [shape: f32[8,4], index: 3, kind: input, shape index: {}]
  %s4 = inlined_call_operand.vmem [shape: f32[8,4], index: 4, kind: input, shape index: {}]
  %s5 = inlined_call_operand.vmem [shape: f32[8,1], index: 5, kind: input, shape index: {}]
  %s6 = inlined_call_operand.hbm [shape: f32[2,8,16], index: 6, kind: output, shape index: {}]
  %s7 = sld [smem:[#allocation0]]
  $region61: #{tpu_custom_call.1} parent=0
    _
  %s9 = ssub.s32 1, %s7
  %s10 = scalar_select 0, %s9, %s7
  $region1: #{tpu_custom_call.1} parent=0
    #allocation2 [shape = 'u8[4096]{0}', space=vmem, size = 0x1000, scoped, tag = 'input window, operand 0']
    #allocation3 [shape = 's32[2]{0}', space=sflag, size = 0x8, scoped, tag = 'scoped memory for tpu_custom_call.1']
    #allocation4 [shape = 's32[2]{0}', space=sflag, size = 0x8, scoped, tag = 'scoped memory for tpu_custom_call.1']
    #allocation5 [shape = 'u8[8192]{0}', space=vmem, size = 0x2000, scoped, tag = 'output window, operand 0']
    %11 = vsyncpa [#allocation3], 0
    %s12 = scalar_lea.sflag [#allocation3], 1
    %13 = vsyncpa %s12, 0
    %14 = vsyncpa [#allocation4], 0
    %s15 = scalar_lea.sflag [#allocation4], 1
    %16 = vsyncpa %s15, 0
    loop: start=0, step=1, limit=4
    $region2: #{tpu_custom_call.1} parent=1 // loop_pre_header
      _
    $region3: #{tpu_custom_call.1} parent=1 // loop_header
      %s18 = sphi 0, %s22
      %p19 = scmp.ge.s32.totalorder %s18, 4
      %s25 = sphi 0, %s37
      %s26 = sphi 0, %s33
      %s27 = sphi 0, %s25
      %s28 = sphi 0, %s26
      %s29 = sphi 0, %s27
      %s30 = sphi 0, %s28
      %s40 = sphi 0, %s42
      %s43 = sphi 0, %s40
      %s44 = sphi 0, %s43
      %s60 = sphi 0, %s44
      %s68 = sphi 0, %s70
      %s71 = sphi 0, %s68
      %s72 = sphi 0, %s71
      %s88 = sphi 0, %s72
      %s96 = sphi 0, %s98
      %s99 = sphi 0, %s96
      %s100 = sphi 0, %s99
      %s116 = sphi 0, %s100
      %s120 = sphi 0, %s120
      %s122 = sphi 0, %s120
      %s123 = sphi 0, %s122
      %s137 = sphi 0, %s123
      %s141 = sphi 0, %s141
      %s143 = sphi 0, %s141
      %s144 = sphi 0, %s143
      %s158 = sphi 0, %s144
      %s162 = sphi 0, %s162
      %s164 = sphi 0, %s162
      %s165 = sphi 0, %s164
      %s179 = sphi 0, %s165
      %s187 = sphi 0, %s189
      %s190 = sphi 0, %s187
      %s191 = sphi 0, %s190
      %s207 = sphi 0, %s191
    $region4: #{tpu_custom_call.1} parent=1 // loop_header_branch
      %21 = sbr.rel (%p19) target = $region8
    $region5: #{tpu_custom_call.1} parent=1 // loop_body
      %s23 = ssub.s32 %s18, 1
      %s24 = ssub.s32 %s18, 2
      %s31 = sadd.s32 1, %s26
      %p32 = scmp.ge.s32.totalorder %s31, 1
      %s33 = scalar_select %p32, 0, %s31
      %s34 = sadd.s32 1, %s25
      %s35 = scalar_select %p32, %s34, %s25
      %p36 = scmp.ge.s32.totalorder %s35, 2
      %s37 = scalar_select %p36, 0, %s35
      %s38 = ssub.s32 %s25, %s37
      %p39 = scmp.eq.s32.totalorder %s38, 0
      %s41 = sadd.s32 %s40, 1
      %s42 = scalar_select %p39, %s40, %s41
      %p45 = pneg %p39
      %p46 = scmp.eq.s32.totalorder %s18, 1
      %p47 = por %p45, %p46
      %p48 = scmp.ne.s32.totalorder %s40, %s43
      %p49 = scmp.eq.s32.totalorder %s18, 0
      %p50 = por %p48, %p49
      %p51 = scmp.ne.s32.totalorder %s40, %s43
      %p52 = scmp.eq.s32.totalorder %s23, 1
      %p53 = por %p51, %p52
      %p54 = scmp.ne.s32.totalorder %s43, %s44
      %p55 = scmp.eq.s32.totalorder %s23, 0
      %p56 = por %p54, %p55
      %p57 = scmp.ne.s32.totalorder %s43, %s44
      %p58 = scmp.eq.s32.totalorder %s24, 1
      %p59 = por %p57, %p58
      %p61 = scmp.ne.s32.totalorder %s44, %s60
      %p62 = scmp.eq.s32.totalorder %s24, 0
      %p63 = por %p61, %p62
      %s64 = ssub.s32 %s25, %s37
      %s65 = ssub.s32 %s26, %s33
      %s66 = sor.u32 %s64, %s65
      %p67 = scmp.eq.s32.totalorder %s66, 0
      %s69 = sadd.s32 %s68, 1
      %s70 = scalar_select %p67, %s68, %s69
      %p73 = pneg %p67
      %p74 = scmp.eq.s32.totalorder %s18, 1
      %p75 = por %p73, %p74
      %p76 = scmp.ne.s32.totalorder %s68, %s71
      %p77 = scmp.eq.s32.totalorder %s18, 0
      %p78 = por %p76, %p77
      %p79 = scmp.ne.s32.totalorder %s68, %s71
      %p80 = scmp.eq.s32.totalorder %s23, 1
      %p81 = por %p79, %p80
      %p82 = scmp.ne.s32.totalorder %s71, %s72
      %p83 = scmp.eq.s32.totalorder %s23, 0
      %p84 = por %p82, %p83
      %p85 = scmp.ne.s32.totalorder %s71, %s72
      %p86 = scmp.eq.s32.totalorder %s24, 1
      %p87 = por %p85, %p86
      %p89 = scmp.ne.s32.totalorder %s72, %s88
      %p90 = scmp.eq.s32.totalorder %s24, 0
      %p91 = por %p89, %p90
      %s92 = ssub.s32 %s25, %s37
      %s93 = ssub.s32 %s26, %s33
      %s94 = sor.u32 %s92, %s93
      %p95 = scmp.eq.s32.totalorder %s94, 0
      %s97 = sadd.s32 %s96, 1
      %s98 = scalar_select %p95, %s96, %s97
      %p101 = pneg %p95
      %p102 = scmp.eq.s32.totalorder %s18, 1
      %p103 = por %p101, %p102
      %p104 = scmp.ne.s32.totalorder %s96, %s99
      %p105 = scmp.eq.s32.totalorder %s18, 0
      %p106 = por %p104, %p105
      %p107 = scmp.ne.s32.totalorder %s96, %s99
      %p108 = scmp.eq.s32.totalorder %s23, 1
      %p109 = por %p107, %p108
      %p110 = scmp.ne.s32.totalorder %s99, %s100
      %p111 = scmp.eq.s32.totalorder %s23, 0
      %p112 = por %p110, %p111
      %p113 = scmp.ne.s32.totalorder %s99, %s100
      %p114 = scmp.eq.s32.totalorder %s24, 1
      %p115 = por %p113, %p114
      %p117 = scmp.ne.s32.totalorder %s100, %s116
      %p118 = scmp.eq.s32.totalorder %s24, 0
      %p119 = por %p117, %p118
      %s121 = sadd.s32 %s120, 1
      %p124 = scmp.eq.s32.totalorder %s18, 1
      %p125 = scmp.ne.s32.totalorder %s120, %s122
      %p126 = scmp.eq.s32.totalorder %s18, 0
      %p127 = por %p125, %p126
      %p128 = scmp.ne.s32.totalorder %s120, %s122
      %p129 = scmp.eq.s32.totalorder %s23, 1
      %p130 = por %p128, %p129
      %p131 = scmp.ne.s32.totalorder %s122, %s123
      %p132 = scmp.eq.s32.totalorder %s23, 0
      %p133 = por %p131, %p132
      %p134 = scmp.ne.s32.totalorder %s122, %s123
      %p135 = scmp.eq.s32.totalorder %s24, 1
      %p136 = por %p134, %p135
      %p138 = scmp.ne.s32.totalorder %s123, %s137
      %p139 = scmp.eq.s32.totalorder %s24, 0
      %p140 = por %p138, %p139
      %s142 = sadd.s32 %s141, 1
      %p145 = scmp.eq.s32.totalorder %s18, 1
      %p146 = scmp.ne.s32.totalorder %s141, %s143
      %p147 = scmp.eq.s32.totalorder %s18, 0
      %p148 = por %p146, %p147
      %p149 = scmp.ne.s32.totalorder %s141, %s143
      %p150 = scmp.eq.s32.totalorder %s23, 1
      %p151 = por %p149, %p150
      %p152 = scmp.ne.s32.totalorder %s143, %s144
      %p153 = scmp.eq.s32.totalorder %s23, 0
      %p154 = por %p152, %p153
      %p155 = scmp.ne.s32.totalorder %s143, %s144
      %p156 = scmp.eq.s32.totalorder %s24, 1
      %p157 = por %p155, %p156
      %p159 = scmp.ne.s32.totalorder %s144, %s158
      %p160 = scmp.eq.s32.totalorder %s24, 0
      %p161 = por %p159, %p160
      %s163 = sadd.s32 %s162, 1
      %p166 = scmp.eq.s32.totalorder %s18, 1
      %p167 = scmp.ne.s32.totalorder %s162, %s164
      %p168 = scmp.eq.s32.totalorder %s18, 0
      %p169 = por %p167, %p168
      %p170 = scmp.ne.s32.totalorder %s162, %s164
      %p171 = scmp.eq.s32.totalorder %s23, 1
      %p172 = por %p170, %p171
      %p173 = scmp.ne.s32.totalorder %s164, %s165
      %p174 = scmp.eq.s32.totalorder %s23, 0
      %p175 = por %p173, %p174
      %p176 = scmp.ne.s32.totalorder %s164, %s165
      %p177 = scmp.eq.s32.totalorder %s24, 1
      %p178 = por %p176, %p177
      %p180 = scmp.ne.s32.totalorder %s165, %s179
      %p181 = scmp.eq.s32.totalorder %s24, 0
      %p182 = por %p180, %p181
      %s183 = ssub.s32 %s25, %s37
      %s184 = ssub.s32 %s26, %s33
      %s185 = sor.u32 %s183, %s184
      %p186 = scmp.eq.s32.totalorder %s185, 0
      %s188 = sadd.s32 %s187, 1
      %s189 = scalar_select %p186, %s187, %s188
      %p192 = pneg %p186
      %p193 = scmp.eq.s32.totalorder %s18, 1
      %p194 = por %p192, %p193
      %p195 = scmp.ne.s32.totalorder %s187, %s190
      %p196 = scmp.eq.s32.totalorder %s18, 0
      %p197 = por %p195, %p196
      %p198 = scmp.ne.s32.totalorder %s187, %s190
      %p199 = scmp.eq.s32.totalorder %s23, 1
      %p200 = por %p198, %p199
      %p201 = scmp.ne.s32.totalorder %s190, %s191
      %p202 = scmp.eq.s32.totalorder %s23, 0
      %p203 = por %p201, %p202
      %p204 = scmp.ne.s32.totalorder %s190, %s191
      %p205 = scmp.eq.s32.totalorder %s24, 1
      %p206 = por %p204, %p205
      %p208 = scmp.ne.s32.totalorder %s191, %s207
      %p209 = scmp.eq.s32.totalorder %s24, 0
      %p210 = por %p208, %p209
      %p211 = scmp.le.s32.totalorder 1, %s18
      %p212 = scmp.lt.s32.totalorder %s18, 3
      %p213 = pnand %p211, %p212
      %p214 = pneg %p213
      // Predicated region
      $region9: #{tpu_custom_call.1} parent=5 // pred_check
        _
      $region10: #{tpu_custom_call.1} parent=5 // pred_check_branch
        %216 = sbr.rel (%p213) target = $region12
      $region11: #{tpu_custom_call.1} parent=5 // pred_region
        %s217 = ssub.s32 %s18, 1
        // Predicated region
        $region13: #{tpu_custom_call.1} parent=11 // pred_check
          %p218 = pneg %p133
        $region14: #{tpu_custom_call.1} parent=11 // pred_check_branch
          %220 = sbr.rel (%p218) target = $region16
        $region15: #{tpu_custom_call.1} parent=11 // pred_region
          _
        $region16: #{tpu_custom_call.1} parent=11 // pred_fallthru
          _
        // Predicated region
        $region17: #{tpu_custom_call.1} parent=11 // pred_check
          %p221 = pneg %p154
        $region18: #{tpu_custom_call.1} parent=11 // pred_check_branch
          %223 = sbr.rel (%p221) target = $region20
        $region19: #{tpu_custom_call.1} parent=11 // pred_region
          _
        $region20: #{tpu_custom_call.1} parent=11 // pred_fallthru
          _
        // Predicated region
        $region21: #{tpu_custom_call.1} parent=11 // pred_check
          %p224 = pneg %p175
        $region22: #{tpu_custom_call.1} parent=11 // pred_check_branch
          %226 = sbr.rel (%p224) target = $region24
        $region23: #{tpu_custom_call.1} parent=11 // pred_region
          _
        $region24: #{tpu_custom_call.1} parent=11 // pred_fallthru
          _
      $region12: #{tpu_custom_call.1} parent=5 // pred_fallthru
        _
      %p227 = scmp.lt.s32.totalorder %s18, 2
      // Predicated region
      $region25: #{tpu_custom_call.1} parent=5 // pred_check
        %p228 = pneg %p227
      $region26: #{tpu_custom_call.1} parent=5 // pred_check_branch
        %230 = sbr.rel (%p228) target = $region28
      $region27: #{tpu_custom_call.1} parent=5 // pred_region
        // Predicated region
        $region29: #{tpu_custom_call.1} parent=27 // pred_check
          %p231 = pneg %p50
        $region30: #{tpu_custom_call.1} parent=27 // pred_check_branch
          %233 = sbr.rel (%p231) target = $region32
        $region31: #{tpu_custom_call.1} parent=27 // pred_region
          %s234 = sand.u32 %s40, 1
          %s235 = scalar_lea.sflag [#allocation3], %s234
          %s236 = sand.u32 %s40, 1
          %s237 = smul.addr %s236, 4
          %s238 = scalar_lea.vmem [#allocation2], %s237
          %s240 = ssub.s32 64, 64
          %241 = vsyncadd %s235, %s240
          %s242 = smul.addr %s25, 64
          %s243 = scalar_lea.hbm %s0, %s242
          %s245 = sshll.u32 %s238, 4
          %s246 = int_to_ptr.vmem [resolvable:$true] %s245
          %248 = dma.hbm_to_vmem [thread:$0]  %s243, 64, %s246, %s235
        $region32: #{tpu_custom_call.1} parent=27 // pred_fallthru
          _
        // Predicated region
        $region33: #{tpu_custom_call.1} parent=27 // pred_check
          %p249 = pneg %p78
        $region34: #{tpu_custom_call.1} parent=27 // pred_check_branch
          %251 = sbr.rel (%p249) target = $region36
        $region35: #{tpu_custom_call.1} parent=27 // pred_region
          %p252 = scmp.lt.s32.totalorder %s25, 1
          %s253 = scalar_select %p252, %s25, 1
          %p254 = scmp.lt.s32.totalorder %s26, 0
          %s255 = scalar_select %p254, %s26, 0
          %s256 = sadd.s32 %s255, %s253
          %s257 = smul.addr %s256, 8
          %s258 = scalar_lea.vmem %s1, %s257
        $region36: #{tpu_custom_call.1} parent=27 // pred_fallthru
          _
        // Predicated region
        $region37: #{tpu_custom_call.1} parent=27 // pred_check
          %p259 = pneg %p106
        $region38: #{tpu_custom_call.1} parent=27 // pred_check_branch
          %261 = sbr.rel (%p259) target = $region40
        $region39: #{tpu_custom_call.1} parent=27 // pred_region
          %p262 = scmp.lt.s32.totalorder %s25, 1
          %s263 = scalar_select %p262, %s25, 1
          %p264 = scmp.lt.s32.totalorder %s26, 0
          %s265 = scalar_select %p264, %s26, 0
          %s266 = sadd.s32 %s265, %s263
          %s267 = smul.addr %s266, 8
          %s268 = scalar_lea.vmem %s2, %s267
        $region40: #{tpu_custom_call.1} parent=27 // pred_fallthru
          _
      $region28: #{tpu_custom_call.1} parent=5 // pred_fallthru
        _
      %p269 = scmp.le.s32.totalorder 1, %s18
      %p270 = scmp.lt.s32.totalorder %s18, 3
      %p271 = pnand %p269, %p270
      %p272 = pneg %p271
      // Predicated region
      $region41: #{tpu_custom_call.1} parent=5 // pred_check
        _
      $region42: #{tpu_custom_call.1} parent=5 // pred_check_branch
        %274 = sbr.rel (%p271) target = $region44
      $region43: #{tpu_custom_call.1} parent=5 // pred_region
        %s275 = ssub.s32 %s18, 1
        %s276 = sand.u32 %s43, 1
        %s277 = scalar_lea.sflag [#allocation3], %s276
        %s278 = sand.u32 %s43, 1
        %s279 = smul.addr %s278, 4
        %s280 = scalar_lea.vmem [#allocation2], %s279
        // Predicated region
        $region45: #{tpu_custom_call.1} parent=43 // pred_check
          %p281 = pneg %p56
        $region46: #{tpu_custom_call.1} parent=43 // pred_check_branch
          %283 = sbr.rel (%p281) target = $region48
        $region47: #{tpu_custom_call.1} parent=43 // pred_region
          %284 = dma.done %s277, 64
        $region48: #{tpu_custom_call.1} parent=43 // pred_fallthru
          _
        %s285 = sand.u32 %s43, 1
        %s286 = scalar_lea.sflag [#allocation3], %s285
        %s287 = sand.u32 %s43, 1
        %s288 = smul.addr %s287, 4
        %s289 = scalar_lea.vmem [#allocation2], %s288
        %p290 = pneg %p56
        %p291 = pneg %p53
        %p292 = scmp.lt.s32.totalorder %s27, 1
        %s293 = scalar_select %p292, %s27, 1
        %p294 = scmp.lt.s32.totalorder %s28, 0
        %s295 = scalar_select %p294, %s28, 0
        %s296 = sadd.s32 %s295, %s293
        %s297 = smul.addr %s296, 8
        %s298 = scalar_lea.vmem %s1, %s297
        %p299 = pneg %p84
        %p300 = pneg %p81
        %p301 = scmp.lt.s32.totalorder %s27, 1
        %s302 = scalar_select %p301, %s27, 1
        %p303 = scmp.lt.s32.totalorder %s28, 0
        %s304 = scalar_select %p303, %s28, 0
        %s305 = sadd.s32 %s304, %s302
        %s306 = smul.addr %s305, 8
        %s307 = scalar_lea.vmem %s2, %s306
        %p308 = pneg %p112
        %p309 = pneg %p109
        %p310 = pneg %p133
        %p311 = pneg %p130
        %p312 = pneg %p154
        %p313 = pneg %p151
        %p314 = pneg %p175
        %p315 = pneg %p172
        %p316 = pneg %p203
        %p317 = pneg %p200
        %s318 = sand.u32 %s190, 1
        %s319 = scalar_lea.sflag [#allocation4], %s318
        %s320 = sand.u32 %s190, 1
        %s321 = smul.addr %s320, 8
        %s322 = scalar_lea.vmem [#allocation5], %s321
        %p323 = scmp.lt.s32.totalorder %s27, 1
        %s324 = scalar_select %p323, %s27, 1
        %p325 = scmp.lt.s32.totalorder %s28, 0
        %s326 = scalar_select %p325, %s28, 0
        %s327 = sadd.s32 %s326, %s324
        %s328 = smul.addr %s327, 8
        %s329 = scalar_lea.vmem %s1, %s328
        %p330 = scmp.lt.s32.totalorder %s27, 1
        %s331 = scalar_select %p330, %s27, 1
        %p332 = scmp.lt.s32.totalorder %s28, 0
        %s333 = scalar_select %p332, %s28, 0
        %s334 = sadd.s32 %s333, %s331
        %s335 = smul.addr %s334, 8
        %s336 = scalar_lea.vmem %s2, %s335
        %v337 = vld [vmem:[%s280] sm:$0xf]
        %v338 = vld [vmem:[%s3] sm:$0xff]
        %vm339 = vcmask 31744
        %v341 = vsel %vm339, %v338, 0
        %vm343 = vcmask 1043456
        %v345 = vsel %vm343, %v337, 0
        %347 = vmatprep.subr.mxu0 0.0
        %348 = vmatpush1.msra.mxu0 0.0
        %349 = vmatprep.subr.mxu0 0.0
        %350 = vmatpush1.msra.mxu0 0.0
        %351 = vmatprep.subr.mxu0 0.0
        %352 = vmatpush1.msra.mxu0 0.0
        %353 = vmatprep.subr.mxu0 0.0
        %354 = vmatpush1.msra.mxu0 0.0
        %355 = vmatprep.subr.mxu0 0.0
        %356 = vmatpush1.msra.mxu0 0.0
        %357 = vmatprep.subr.mxu0 0.0
        %358 = vmatpush1.msra.mxu0 0.0
        %359 = vmatprep.subr.mxu0 0.0
        %360 = vmatpush1.msra.mxu0 0.0
        %361 = vmatprep.subr.mxu0 0.0
        %362 = vmatpush1.msra.mxu0 0.0
        %363 = vmatprep.subr.mxu0 0.0
        %364 = vmatpush1.msra.mxu0 0.0
        %365 = vmatprep.subr.mxu0 0.0
        %366 = vmatpush1.msra.mxu0 0.0
        %367 = vmatprep.subr.mxu0 0.0
        %368 = vmatpush1.msra.mxu0 0.0
        %369 = vmatprep.subr.mxu0 0.0
        %370 = vmatpush1.msra.mxu0 0.0
        %371 = vmatprep.subr.mxu0 0.0
        %372 = vmatpush1.msra.mxu0 0.0
        %373 = vmatprep.subr.mxu0 0.0
        %374 = vmatpush1.msra.mxu0 0.0
        %375 = vmatprep.subr.mxu0 0.0
        %376 = vmatpush1.msra.mxu0 0.0
        %377 = vmatprep.subr.mxu0 0.0
        %378 = vmatpush1.msra.mxu0 %v345
        %379 = vmatprep.subr.mxu0 0.0
        %380 = vmatpush2.msra.mxu0 0.0
        %381 = vmatprep.subr.mxu0 0.0
        %382 = vmatpush2.msra.mxu0 0.0
        %383 = vmatprep.subr.mxu0 0.0
        %384 = vmatpush2.msra.mxu0 0.0
        %385 = vmatprep.subr.mxu0 0.0
        %386 = vmatpush2.msra.mxu0 0.0
        %387 = vmatprep.subr.mxu0 0.0
        %388 = vmatpush2.msra.mxu0 0.0
        %389 = vmatprep.subr.mxu0 0.0
        %390 = vmatpush2.msra.mxu0 0.0
        %391 = vmatprep.subr.mxu0 0.0
        %392 = vmatpush2.msra.mxu0 0.0
        %393 = vmatprep.subr.mxu0 0.0
        %394 = vmatpush2.msra.mxu0 0.0
        %395 = vmatprep.subr.mxu0 0.0
        %396 = vmatpush2.msra.mxu0 0.0
        %397 = vmatprep.subr.mxu0 0.0
        %398 = vmatpush2.msra.mxu0 0.0
        %399 = vmatprep.subr.mxu0 0.0
        %400 = vmatpush2.msra.mxu0 0.0
        %401 = vmatprep.subr.mxu0 0.0
        %402 = vmatpush2.msra.mxu0 0.0
        %403 = vmatprep.subr.mxu0 0.0
        %404 = vmatpush2.msra.mxu0 0.0
        %405 = vmatprep.subr.mxu0 0.0
        %406 = vmatpush2.msra.mxu0 0.0
        %407 = vmatprep.subr.mxu0 0.0
        %408 = vmatpush2.msra.mxu0 0.0
        %409 = vmatprep.subr.mxu0 0.0
        %410 = vmatpush2.msra.mxu0 0.0
        %411 = vmatprep.mubr.f32.mxu0 0.0
        %412 = vmatmul.mubr.f32.gmra.mxu0 %v341
        %v413 = vpop.f32.mrf.mxu0
        %v414 = vadd.f32 0.0, %v413
        %v415 = vpop.f32.mrf.mxu0
        %416 = vdwg.mxu0
        %v417 = vld [vmem:[%s4] sm:$0xff]
        %v419 = vsel %vm339, %v417, 0
        %421 = vmatprep.subr.mxu0 0.0
        %422 = vmatpush1.msra.mxu0 0.0
        %423 = vmatprep.subr.mxu0 0.0
        %424 = vmatpush1.msra.mxu0 0.0
        %425 = vmatprep.subr.mxu0 0.0
        %426 = vmatpush1.msra.mxu0 0.0
        %427 = vmatprep.subr.mxu0 0.0
        %428 = vmatpush1.msra.mxu0 0.0
        %429 = vmatprep.subr.mxu0 0.0
        %430 = vmatpush1.msra.mxu0 0.0
        %431 = vmatprep.subr.mxu0 0.0
        %432 = vmatpush1.msra.mxu0 0.0
        %433 = vmatprep.subr.mxu0 0.0
        %434 = vmatpush1.msra.mxu0 0.0
        %435 = vmatprep.subr.mxu0 0.0
        %436 = vmatpush1.msra.mxu0 0.0
        %437 = vmatprep.subr.mxu0 0.0
        %438 = vmatpush1.msra.mxu0 0.0
        %439 = vmatprep.subr.mxu0 0.0
        %440 = vmatpush1.msra.mxu0 0.0
        %441 = vmatprep.subr.mxu0 0.0
        %442 = vmatpush1.msra.mxu0 0.0
        %443 = vmatprep.subr.mxu0 0.0
        %444 = vmatpush1.msra.mxu0 0.0
        %445 = vmatprep.subr.mxu0 0.0
        %446 = vmatpush1.msra.mxu0 0.0
        %447 = vmatprep.subr.mxu0 0.0
        %448 = vmatpush1.msra.mxu0 0.0
        %449 = vmatprep.subr.mxu0 0.0
        %450 = vmatpush1.msra.mxu0 0.0
        %451 = vmatprep.subr.mxu0 0.0
        %452 = vmatpush1.msra.mxu0 %v345
        %453 = vmatprep.subr.mxu0 0.0
        %454 = vmatpush2.msra.mxu0 0.0
        %455 = vmatprep.subr.mxu0 0.0
        %456 = vmatpush2.msra.mxu0 0.0
        %457 = vmatprep.subr.mxu0 0.0
        %458 = vmatpush2.msra.mxu0 0.0
        %459 = vmatprep.subr.mxu0 0.0
        %460 = vmatpush2.msra.mxu0 0.0
        %461 = vmatprep.subr.mxu0 0.0
        %462 = vmatpush2.msra.mxu0 0.0
        %463 = vmatprep.subr.mxu0 0.0
        %464 = vmatpush2.msra.mxu0 0.0
        %465 = vmatprep.subr.mxu0 0.0
        %466 = vmatpush2.msra.mxu0 0.0
        %467 = vmatprep.subr.mxu0 0.0
        %468 = vmatpush2.msra.mxu0 0.0
        %469 = vmatprep.subr.mxu0 0.0
        %470 = vmatpush2.msra.mxu0 0.0
        %471 = vmatprep.subr.mxu0 0.0
        %472 = vmatpush2.msra.mxu0 0.0
        %473 = vmatprep.subr.mxu0 0.0
        %474 = vmatpush2.msra.mxu0 0.0
        %475 = vmatprep.subr.mxu0 0.0
        %476 = vmatpush2.msra.mxu0 0.0
        %477 = vmatprep.subr.mxu0 0.0
        %478 = vmatpush2.msra.mxu0 0.0
        %479 = vmatprep.subr.mxu0 0.0
        %480 = vmatpush2.msra.mxu0 0.0
        %481 = vmatprep.subr.mxu0 0.0
        %482 = vmatpush2.msra.mxu0 0.0
        %483 = vmatprep.subr.mxu0 0.0
        %484 = vmatpush2.msra.mxu0 0.0
        %485 = vmatprep.mubr.f32.mxu0 0.0
        %486 = vmatmul.mubr.f32.gmra.mxu0 %v419
        %v487 = vpop.f32.mrf.mxu0
        %v488 = vadd.f32 0.0, %v487
        %v489 = vpop.f32.mrf.mxu0
        %490 = vdwg.mxu0
        %v491 = vld [vmem:[%s5] sm:$0xff]
        %v492 = vlaneseq
        %v493 = vshrl.u32 %v492, 7
        %v494 = vadd.s32 %v493, 8
        %v495 = vld [vmem:[%s329] sm:$0x1]
        %v496 = vld [vmem:[%s336] sm:$0x1]
        %v497 = vlaneseq
        %v498 = vshrl.u32 %v497, 7
        %v499 = vsub.s32 0, %v498
        %v500 = vrot.slane %v495, %v499
        %vm501 = vcmp.eq.s32.totalorder %v493, %v500
        %vm502 = vcmp.eq.s32.totalorder %v494, %v500
        %v503 = vsel %vm501, 1.0, 0.0
        %v504 = vsel %vm502, 1.0, 0.0
        %v505 = vlaneseq
        %v506 = vshrl.u32 %v505, 7
        %v507 = vsub.s32 0, %v506
        %v508 = vrot.slane %v496, %v507
        %vm509 = vcmp.eq.s32.totalorder %v493, %v508
        %vm510 = vcmp.eq.s32.totalorder %v494, %v508
        %v511 = vsel %vm509, 1.0, 0.0
        %v512 = vsel %vm510, 1.0, 0.0
        %vm513 = vcmask 130048
        %v515 = vsel %vm513, %v488, 0
        %517 = vmatprep.subr.mxu0 0.0
        %518 = vmatpush1.msra.mxu0 0.0
        %519 = vmatprep.subr.mxu0 0.0
        %520 = vmatpush1.msra.mxu0 0.0
        %521 = vmatprep.subr.mxu0 0.0
        %522 = vmatpush1.msra.mxu0 0.0
        %523 = vmatprep.subr.mxu0 0.0
        %524 = vmatpush1.msra.mxu0 0.0
        %525 = vmatprep.subr.mxu0 0.0
        %526 = vmatpush1.msra.mxu0 0.0
        %527 = vmatprep.subr.mxu0 0.0
        %528 = vmatpush1.msra.mxu0 0.0
        %529 = vmatprep.subr.mxu0 0.0
        %530 = vmatpush1.msra.mxu0 0.0
        %531 = vmatprep.subr.mxu0 0.0
        %532 = vmatpush1.msra.mxu0 0.0
        %533 = vmatprep.subr.mxu0 0.0
        %534 = vmatpush1.msra.mxu0 0.0
        %535 = vmatprep.subr.mxu0 0.0
        %536 = vmatpush1.msra.mxu0 0.0
        %537 = vmatprep.subr.mxu0 0.0
        %538 = vmatpush1.msra.mxu0 0.0
        %539 = vmatprep.subr.mxu0 0.0
        %540 = vmatpush1.msra.mxu0 0.0
        %541 = vmatprep.subr.mxu0 0.0
        %542 = vmatpush1.msra.mxu0 0.0
        %543 = vmatprep.subr.mxu0 0.0
        %544 = vmatpush1.msra.mxu0 0.0
        %545 = vmatprep.subr.mxu0 0.0
        %546 = vmatpush1.msra.mxu0 %v512
        %547 = vmatprep.subr.mxu0 0.0
        %548 = vmatpush1.msra.mxu0 %v511
        %549 = vmatprep.subr.mxu0 0.0
        %550 = vmatpush2.msra.mxu0 0.0
        %551 = vmatprep.subr.mxu0 0.0
        %552 = vmatpush2.msra.mxu0 0.0
        %553 = vmatprep.subr.mxu0 0.0
        %554 = vmatpush2.msra.mxu0 0.0
        %555 = vmatprep.subr.mxu0 0.0
        %556 = vmatpush2.msra.mxu0 0.0
        %557 = vmatprep.subr.mxu0 0.0
        %558 = vmatpush2.msra.mxu0 0.0
        %559 = vmatprep.subr.mxu0 0.0
        %560 = vmatpush2.msra.mxu0 0.0
        %561 = vmatprep.subr.mxu0 0.0
        %562 = vmatpush2.msra.mxu0 0.0
        %563 = vmatprep.subr.mxu0 0.0
        %564 = vmatpush2.msra.mxu0 0.0
        %565 = vmatprep.subr.mxu0 0.0
        %566 = vmatpush2.msra.mxu0 0.0
        %567 = vmatprep.subr.mxu0 0.0
        %568 = vmatpush2.msra.mxu0 0.0
        %569 = vmatprep.subr.mxu0 0.0
        %570 = vmatpush2.msra.mxu0 0.0
        %571 = vmatprep.subr.mxu0 0.0
        %572 = vmatpush2.msra.mxu0 0.0
        %573 = vmatprep.subr.mxu0 0.0
        %574 = vmatpush2.msra.mxu0 0.0
        %575 = vmatprep.subr.mxu0 0.0
        %576 = vmatpush2.msra.mxu0 0.0
        %577 = vmatprep.subr.mxu0 0.0
        %578 = vmatpush2.msra.mxu0 0.0
        %579 = vmatprep.subr.mxu0 0.0
        %580 = vmatpush2.msra.mxu0 0.0
        %581 = vmatprep.mubr.f32.mxu0 0.0
        %582 = vmatmul.mubr.f32.gmra.mxu0 %v515
        %v583 = vpop.f32.mrf.mxu0
        %v584 = vadd.f32 0.0, %v583
        %v585 = vpop.f32.mrf.mxu0
        %586 = vdwg.mxu0
        %v588 = vsel %vm513, %v414, 0
        %590 = vmatprep.subr.mxu0 0.0
        %591 = vmatpush1.msra.mxu0 0.0
        %592 = vmatprep.subr.mxu0 0.0
        %593 = vmatpush1.msra.mxu0 0.0
        %594 = vmatprep.subr.mxu0 0.0
        %595 = vmatpush1.msra.mxu0 0.0
        %596 = vmatprep.subr.mxu0 0.0
        %597 = vmatpush1.msra.mxu0 0.0
        %598 = vmatprep.subr.mxu0 0.0
        %599 = vmatpush1.msra.mxu0 0.0
        %600 = vmatprep.subr.mxu0 0.0
        %601 = vmatpush1.msra.mxu0 0.0
        %602 = vmatprep.subr.mxu0 0.0
        %603 = vmatpush1.msra.mxu0 0.0
        %604 = vmatprep.subr.mxu0 0.0
        %605 = vmatpush1.msra.mxu0 0.0
        %606 = vmatprep.subr.mxu0 0.0
        %607 = vmatpush1.msra.mxu0 0.0
        %608 = vmatprep.subr.mxu0 0.0
        %609 = vmatpush1.msra.mxu0 0.0
        %610 = vmatprep.subr.mxu0 0.0
        %611 = vmatpush1.msra.mxu0 0.0
        %612 = vmatprep.subr.mxu0 0.0
        %613 = vmatpush1.msra.mxu0 0.0
        %614 = vmatprep.subr.mxu0 0.0
        %615 = vmatpush1.msra.mxu0 0.0
        %616 = vmatprep.subr.mxu0 0.0
        %617 = vmatpush1.msra.mxu0 0.0
        %618 = vmatprep.subr.mxu0 0.0
        %619 = vmatpush1.msra.mxu0 %v504
        %620 = vmatprep.subr.mxu0 0.0
        %621 = vmatpush1.msra.mxu0 %v503
        %622 = vmatprep.subr.mxu0 0.0
        %623 = vmatpush2.msra.mxu0 0.0
        %624 = vmatprep.subr.mxu0 0.0
        %625 = vmatpush2.msra.mxu0 0.0
        %626 = vmatprep.subr.mxu0 0.0
        %627 = vmatpush2.msra.mxu0 0.0
        %628 = vmatprep.subr.mxu0 0.0
        %629 = vmatpush2.msra.mxu0 0.0
        %630 = vmatprep.subr.mxu0 0.0
        %631 = vmatpush2.msra.mxu0 0.0
        %632 = vmatprep.subr.mxu0 0.0
        %633 = vmatpush2.msra.mxu0 0.0
        %634 = vmatprep.subr.mxu0 0.0
        %635 = vmatpush2.msra.mxu0 0.0
        %636 = vmatprep.subr.mxu0 0.0
        %637 = vmatpush2.msra.mxu0 0.0
        %638 = vmatprep.subr.mxu0 0.0
        %639 = vmatpush2.msra.mxu0 0.0
        %640 = vmatprep.subr.mxu0 0.0
        %641 = vmatpush2.msra.mxu0 0.0
        %642 = vmatprep.subr.mxu0 0.0
        %643 = vmatpush2.msra.mxu0 0.0
        %644 = vmatprep.subr.mxu0 0.0
        %645 = vmatpush2.msra.mxu0 0.0
        %646 = vmatprep.subr.mxu0 0.0
        %647 = vmatpush2.msra.mxu0 0.0
        %648 = vmatprep.subr.mxu0 0.0
        %649 = vmatpush2.msra.mxu0 0.0
        %650 = vmatprep.subr.mxu0 0.0
        %651 = vmatpush2.msra.mxu0 0.0
        %652 = vmatprep.subr.mxu0 0.0
        %653 = vmatpush2.msra.mxu0 0.0
        %654 = vmatprep.mubr.f32.mxu0 0.0
        %655 = vmatmul.mubr.f32.gmra.mxu0 %v588
        %v656 = vpop.f32.mrf.mxu0
        %v657 = vadd.f32 %v584, %v656
        %v658 = vpop.f32.mrf.mxu0
        %659 = vdwg.mxu0
        %661 = vset.pattern.permute.xlu0 0
        %662 = vperm.xlu0 %661, %v491
        %v663 = vpop.permute.xlu0 %662
        %v665 = vadd.f32 %v657, %v663
        %v666 = vmax.f32 %v665, 0.0
        %v667 = vld [vmem:[%s329 + $0x1] sm:$0x1]
        %v668 = vld [vmem:[%s336 + $0x1] sm:$0x1]
        %v669 = vlaneseq
        %v670 = vshrl.u32 %v669, 7
        %v671 = vsub.s32 0, %v670
        %v672 = vrot.slane %v667, %v671
        %vm673 = vcmp.eq.s32.totalorder %v493, %v672
        %vm674 = vcmp.eq.s32.totalorder %v494, %v672
        %v675 = vsel %vm673, 1.0, 0.0
        %v676 = vsel %vm674, 1.0, 0.0
        %v677 = vlaneseq
        %v678 = vshrl.u32 %v677, 7
        %v679 = vsub.s32 0, %v678
        %v680 = vrot.slane %v668, %v679
        %vm681 = vcmp.eq.s32.totalorder %v493, %v680
        %vm682 = vcmp.eq.s32.totalorder %v494, %v680
        %v683 = vsel %vm681, 1.0, 0.0
        %v684 = vsel %vm682, 1.0, 0.0
        %685 = vmatprep.subr.mxu0 0.0
        %686 = vmatpush1.msra.mxu0 0.0
        %687 = vmatprep.subr.mxu0 0.0
        %688 = vmatpush1.msra.mxu0 0.0
        %689 = vmatprep.subr.mxu0 0.0
        %690 = vmatpush1.msra.mxu0 0.0
        %691 = vmatprep.subr.mxu0 0.0
        %692 = vmatpush1.msra.mxu0 0.0
        %693 = vmatprep.subr.mxu0 0.0
        %694 = vmatpush1.msra.mxu0 0.0
        %695 = vmatprep.subr.mxu0 0.0
        %696 = vmatpush1.msra.mxu0 0.0
        %697 = vmatprep.subr.mxu0 0.0
        %698 = vmatpush1.msra.mxu0 0.0
        %699 = vmatprep.subr.mxu0 0.0
        %700 = vmatpush1.msra.mxu0 0.0
        %701 = vmatprep.subr.mxu0 0.0
        %702 = vmatpush1.msra.mxu0 0.0
        %703 = vmatprep.subr.mxu0 0.0
        %704 = vmatpush1.msra.mxu0 0.0
        %705 = vmatprep.subr.mxu0 0.0
        %706 = vmatpush1.msra.mxu0 0.0
        %707 = vmatprep.subr.mxu0 0.0
        %708 = vmatpush1.msra.mxu0 0.0
        %709 = vmatprep.subr.mxu0 0.0
        %710 = vmatpush1.msra.mxu0 0.0
        %711 = vmatprep.subr.mxu0 0.0
        %712 = vmatpush1.msra.mxu0 0.0
        %713 = vmatprep.subr.mxu0 0.0
        %714 = vmatpush1.msra.mxu0 %v684
        %715 = vmatprep.subr.mxu0 0.0
        %716 = vmatpush1.msra.mxu0 %v683
        %717 = vmatprep.subr.mxu0 0.0
        %718 = vmatpush2.msra.mxu0 0.0
        %719 = vmatprep.subr.mxu0 0.0
        %720 = vmatpush2.msra.mxu0 0.0
        %721 = vmatprep.subr.mxu0 0.0
        %722 = vmatpush2.msra.mxu0 0.0
        %723 = vmatprep.subr.mxu0 0.0
        %724 = vmatpush2.msra.mxu0 0.0
        %725 = vmatprep.subr.mxu0 0.0
        %726 = vmatpush2.msra.mxu0 0.0
        %727 = vmatprep.subr.mxu0 0.0
        %728 = vmatpush2.msra.mxu0 0.0
        %729 = vmatprep.subr.mxu0 0.0
        %730 = vmatpush2.msra.mxu0 0.0
        %731 = vmatprep.subr.mxu0 0.0
        %732 = vmatpush2.msra.mxu0 0.0
        %733 = vmatprep.subr.mxu0 0.0
        %734 = vmatpush2.msra.mxu0 0.0
        %735 = vmatprep.subr.mxu0 0.0
        %736 = vmatpush2.msra.mxu0 0.0
        %737 = vmatprep.subr.mxu0 0.0
        %738 = vmatpush2.msra.mxu0 0.0
        %739 = vmatprep.subr.mxu0 0.0
        %740 = vmatpush2.msra.mxu0 0.0
        %741 = vmatprep.subr.mxu0 0.0
        %742 = vmatpush2.msra.mxu0 0.0
        %743 = vmatprep.subr.mxu0 0.0
        %744 = vmatpush2.msra.mxu0 0.0
        %745 = vmatprep.subr.mxu0 0.0
        %746 = vmatpush2.msra.mxu0 0.0
        %747 = vmatprep.subr.mxu0 0.0
        %748 = vmatpush2.msra.mxu0 0.0
        %749 = vmatprep.mubr.f32.mxu0 0.0
        %750 = vmatmul.mubr.f32.gmra.mxu0 %v515
        %v751 = vpop.f32.mrf.mxu0
        %v752 = vadd.f32 0.0, %v751
        %v753 = vpop.f32.mrf.mxu0
        %754 = vdwg.mxu0
        %755 = vmatprep.subr.mxu0 0.0
        %756 = vmatpush1.msra.mxu0 0.0
        %757 = vmatprep.subr.mxu0 0.0
        %758 = vmatpush1.msra.mxu0 0.0
        %759 = vmatprep.subr.mxu0 0.0
        %760 = vmatpush1.msra.mxu0 0.0
        %761 = vmatprep.subr.mxu0 0.0
        %762 = vmatpush1.msra.mxu0 0.0
        %763 = vmatprep.subr.mxu0 0.0
        %764 = vmatpush1.msra.mxu0 0.0
        %765 = vmatprep.subr.mxu0 0.0
        %766 = vmatpush1.msra.mxu0 0.0
        %767 = vmatprep.subr.mxu0 0.0
        %768 = vmatpush1.msra.mxu0 0.0
        %769 = vmatprep.subr.mxu0 0.0
        %770 = vmatpush1.msra.mxu0 0.0
        %771 = vmatprep.subr.mxu0 0.0
        %772 = vmatpush1.msra.mxu0 0.0
        %773 = vmatprep.subr.mxu0 0.0
        %774 = vmatpush1.msra.mxu0 0.0
        %775 = vmatprep.subr.mxu0 0.0
        %776 = vmatpush1.msra.mxu0 0.0
        %777 = vmatprep.subr.mxu0 0.0
        %778 = vmatpush1.msra.mxu0 0.0
        %779 = vmatprep.subr.mxu0 0.0
        %780 = vmatpush1.msra.mxu0 0.0
        %781 = vmatprep.subr.mxu0 0.0
        %782 = vmatpush1.msra.mxu0 0.0
        %783 = vmatprep.subr.mxu0 0.0
        %784 = vmatpush1.msra.mxu0 %v676
        %785 = vmatprep.subr.mxu0 0.0
        %786 = vmatpush1.msra.mxu0 %v675
        %787 = vmatprep.subr.mxu0 0.0
        %788 = vmatpush2.msra.mxu0 0.0
        %789 = vmatprep.subr.mxu0 0.0
        %790 = vmatpush2.msra.mxu0 0.0
        %791 = vmatprep.subr.mxu0 0.0
        %792 = vmatpush2.msra.mxu0 0.0
        %793 = vmatprep.subr.mxu0 0.0
        %794 = vmatpush2.msra.mxu0 0.0
        %795 = vmatprep.subr.mxu0 0.0
        %796 = vmatpush2.msra.mxu0 0.0
        %797 = vmatprep.subr.mxu0 0.0
        %798 = vmatpush2.msra.mxu0 0.0
        %799 = vmatprep.subr.mxu0 0.0
        %800 = vmatpush2.msra.mxu0 0.0
        %801 = vmatprep.subr.mxu0 0.0
        %802 = vmatpush2.msra.mxu0 0.0
        %803 = vmatprep.subr.mxu0 0.0
        %804 = vmatpush2.msra.mxu0 0.0
        %805 = vmatprep.subr.mxu0 0.0
        %806 = vmatpush2.msra.mxu0 0.0
        %807 = vmatprep.subr.mxu0 0.0
        %808 = vmatpush2.msra.mxu0 0.0
        %809 = vmatprep.subr.mxu0 0.0
        %810 = vmatpush2.msra.mxu0 0.0
        %811 = vmatprep.subr.mxu0 0.0
        %812 = vmatpush2.msra.mxu0 0.0
        %813 = vmatprep.subr.mxu0 0.0
        %814 = vmatpush2.msra.mxu0 0.0
        %815 = vmatprep.subr.mxu0 0.0
        %816 = vmatpush2.msra.mxu0 0.0
        %817 = vmatprep.subr.mxu0 0.0
        %818 = vmatpush2.msra.mxu0 0.0
        %819 = vmatprep.mubr.f32.mxu0 0.0
        %820 = vmatmul.mubr.f32.gmra.mxu0 %v588
        %v821 = vpop.f32.mrf.mxu0
        %v822 = vadd.f32 %v752, %v821
        %v823 = vpop.f32.mrf.mxu0
        %824 = vdwg.mxu0
        %v825 = vadd.f32 %v822, %v663
        %v826 = vmax.f32 %v825, 0.0
        %v827 = vmax.f32 %v666, %v826
        %v828 = vld [vmem:[%s329 + $0x2] sm:$0x1]
        %v829 = vld [vmem:[%s336 + $0x2] sm:$0x1]
        %v830 = vlaneseq
        %v831 = vshrl.u32 %v830, 7
        %v832 = vsub.s32 0, %v831
        %v833 = vrot.slane %v828, %v832
        %vm834 = vcmp.eq.s32.totalorder %v493, %v833
        %vm835 = vcmp.eq.s32.totalorder %v494, %v833
        %v836 = vsel %vm834, 1.0, 0.0
        %v837 = vsel %vm835, 1.0, 0.0
        %v838 = vlaneseq
        %v839 = vshrl.u32 %v838, 7
        %v840 = vsub.s32 0, %v839
        %v841 = vrot.slane %v829, %v840
        %vm842 = vcmp.eq.s32.totalorder %v493, %v841
        %vm843 = vcmp.eq.s32.totalorder %v494, %v841
        %v844 = vsel %vm842, 1.0, 0.0
        %v845 = vsel %vm843, 1.0, 0.0
        %846 = vmatprep.subr.mxu0 0.0
        %847 = vmatpush1.msra.mxu0 0.0
        %848 = vmatprep.subr.mxu0 0.0
        %849 = vmatpush1.msra.mxu0 0.0
        %850 = vmatprep.subr.mxu0 0.0
        %851 = vmatpush1.msra.mxu0 0.0
        %852 = vmatprep.subr.mxu0 0.0
        %853 = vmatpush1.msra.mxu0 0.0
        %854 = vmatprep.subr.mxu0 0.0
        %855 = vmatpush1.msra.mxu0 0.0
        %856 = vmatprep.subr.mxu0 0.0
        %857 = vmatpush1.msra.mxu0 0.0
        %858 = vmatprep.subr.mxu0 0.0
        %859 = vmatpush1.msra.mxu0 0.0
        %860 = vmatprep.subr.mxu0 0.0
        %861 = vmatpush1.msra.mxu0 0.0
        %862 = vmatprep.subr.mxu0 0.0
        %863 = vmatpush1.msra.mxu0 0.0
        %864 = vmatprep.subr.mxu0 0.0
        %865 = vmatpush1.msra.mxu0 0.0
        %866 = vmatprep.subr.mxu0 0.0
        %867 = vmatpush1.msra.mxu0 0.0
        %868 = vmatprep.subr.mxu0 0.0
        %869 = vmatpush1.msra.mxu0 0.0
        %870 = vmatprep.subr.mxu0 0.0
        %871 = vmatpush1.msra.mxu0 0.0
        %872 = vmatprep.subr.mxu0 0.0
        %873 = vmatpush1.msra.mxu0 0.0
        %874 = vmatprep.subr.mxu0 0.0
        %875 = vmatpush1.msra.mxu0 %v845
        %876 = vmatprep.subr.mxu0 0.0
        %877 = vmatpush1.msra.mxu0 %v844
        %878 = vmatprep.subr.mxu0 0.0
        %879 = vmatpush2.msra.mxu0 0.0
        %880 = vmatprep.subr.mxu0 0.0
        %881 = vmatpush2.msra.mxu0 0.0
        %882 = vmatprep.subr.mxu0 0.0
        %883 = vmatpush2.msra.mxu0 0.0
        %884 = vmatprep.subr.mxu0 0.0
        %885 = vmatpush2.msra.mxu0 0.0
        %886 = vmatprep.subr.mxu0 0.0
        %887 = vmatpush2.msra.mxu0 0.0
        %888 = vmatprep.subr.mxu0 0.0
        %889 = vmatpush2.msra.mxu0 0.0
        %890 = vmatprep.subr.mxu0 0.0
        %891 = vmatpush2.msra.mxu0 0.0
        %892 = vmatprep.subr.mxu0 0.0
        %893 = vmatpush2.msra.mxu0 0.0
        %894 = vmatprep.subr.mxu0 0.0
        %895 = vmatpush2.msra.mxu0 0.0
        %896 = vmatprep.subr.mxu0 0.0
        %897 = vmatpush2.msra.mxu0 0.0
        %898 = vmatprep.subr.mxu0 0.0
        %899 = vmatpush2.msra.mxu0 0.0
        %900 = vmatprep.subr.mxu0 0.0
        %901 = vmatpush2.msra.mxu0 0.0
        %902 = vmatprep.subr.mxu0 0.0
        %903 = vmatpush2.msra.mxu0 0.0
        %904 = vmatprep.subr.mxu0 0.0
        %905 = vmatpush2.msra.mxu0 0.0
        %906 = vmatprep.subr.mxu0 0.0
        %907 = vmatpush2.msra.mxu0 0.0
        %908 = vmatprep.subr.mxu0 0.0
        %909 = vmatpush2.msra.mxu0 0.0
        %910 = vmatprep.mubr.f32.mxu0 0.0
        %911 = vmatmul.mubr.f32.gmra.mxu0 %v515
        %v912 = vpop.f32.mrf.mxu0
        %v913 = vadd.f32 0.0, %v912
        %v914 = vpop.f32.mrf.mxu0
        %915 = vdwg.mxu0
        %916 = vmatprep.subr.mxu0 0.0
        %917 = vmatpush1.msra.mxu0 0.0
        %918 = vmatprep.subr.mxu0 0.0
        %919 = vmatpush1.msra.mxu0 0.0
        %920 = vmatprep.subr.mxu0 0.0
        %921 = vmatpush1.msra.mxu0 0.0
        %922 = vmatprep.subr.mxu0 0.0
        %923 = vmatpush1.msra.mxu0 0.0
        %924 = vmatprep.subr.mxu0 0.0
        %925 = vmatpush1.msra.mxu0 0.0
        %926 = vmatprep.subr.mxu0 0.0
        %927 = vmatpush1.msra.mxu0 0.0
        %928 = vmatprep.subr.mxu0 0.0
        %929 = vmatpush1.msra.mxu0 0.0
        %930 = vmatprep.subr.mxu0 0.0
        %931 = vmatpush1.msra.mxu0 0.0
        %932 = vmatprep.subr.mxu0 0.0
        %933 = vmatpush1.msra.mxu0 0.0
        %934 = vmatprep.subr.mxu0 0.0
        %935 = vmatpush1.msra.mxu0 0.0
        %936 = vmatprep.subr.mxu0 0.0
        %937 = vmatpush1.msra.mxu0 0.0
        %938 = vmatprep.subr.mxu0 0.0
        %939 = vmatpush1.msra.mxu0 0.0
        %940 = vmatprep.subr.mxu0 0.0
        %941 = vmatpush1.msra.mxu0 0.0
        %942 = vmatprep.subr.mxu0 0.0
        %943 = vmatpush1.msra.mxu0 0.0
        %944 = vmatprep.subr.mxu0 0.0
        %945 = vmatpush1.msra.mxu0 %v837
        %946 = vmatprep.subr.mxu0 0.0
        %947 = vmatpush1.msra.mxu0 %v836
        %948 = vmatprep.subr.mxu0 0.0
        %949 = vmatpush2.msra.mxu0 0.0
        %950 = vmatprep.subr.mxu0 0.0
        %951 = vmatpush2.msra.mxu0 0.0
        %952 = vmatprep.subr.mxu0 0.0
        %953 = vmatpush2.msra.mxu0 0.0
        %954 = vmatprep.subr.mxu0 0.0
        %955 = vmatpush2.msra.mxu0 0.0
        %956 = vmatprep.subr.mxu0 0.0
        %957 = vmatpush2.msra.mxu0 0.0
        %958 = vmatprep.subr.mxu0 0.0
        %959 = vmatpush2.msra.mxu0 0.0
        %960 = vmatprep.subr.mxu0 0.0
        %961 = vmatpush2.msra.mxu0 0.0
        %962 = vmatprep.subr.mxu0 0.0
        %963 = vmatpush2.msra.mxu0 0.0
        %964 = vmatprep.subr.mxu0 0.0
        %965 = vmatpush2.msra.mxu0 0.0
        %966 = vmatprep.subr.mxu0 0.0
        %967 = vmatpush2.msra.mxu0 0.0
        %968 = vmatprep.subr.mxu0 0.0
        %969 = vmatpush2.msra.mxu0 0.0
        %970 = vmatprep.subr.mxu0 0.0
        %971 = vmatpush2.msra.mxu0 0.0
        %972 = vmatprep.subr.mxu0 0.0
        %973 = vmatpush2.msra.mxu0 0.0
        %974 = vmatprep.subr.mxu0 0.0
        %975 = vmatpush2.msra.mxu0 0.0
        %976 = vmatprep.subr.mxu0 0.0
        %977 = vmatpush2.msra.mxu0 0.0
        %978 = vmatprep.subr.mxu0 0.0
        %979 = vmatpush2.msra.mxu0 0.0
        %980 = vmatprep.mubr.f32.mxu0 0.0
        %981 = vmatmul.mubr.f32.gmra.mxu0 %v588
        %v982 = vpop.f32.mrf.mxu0
        %v983 = vadd.f32 %v913, %v982
        %v984 = vpop.f32.mrf.mxu0
        %985 = vdwg.mxu0
        %v986 = vadd.f32 %v983, %v663
        %v987 = vmax.f32 %v986, 0.0
        %v988 = vmax.f32 %v827, %v987
        %v989 = vld [vmem:[%s329 + $0x3] sm:$0x1]
        %v990 = vld [vmem:[%s336 + $0x3] sm:$0x1]
        %v991 = vlaneseq
        %v992 = vshrl.u32 %v991, 7
        %v993 = vsub.s32 0, %v992
        %v994 = vrot.slane %v989, %v993
        %vm995 = vcmp.eq.s32.totalorder %v493, %v994
        %vm996 = vcmp.eq.s32.totalorder %v494, %v994
        %v997 = vsel %vm995, 1.0, 0.0
        %v998 = vsel %vm996, 1.0, 0.0
        %v999 = vlaneseq
        %v1000 = vshrl.u32 %v999, 7
        %v1001 = vsub.s32 0, %v1000
        %v1002 = vrot.slane %v990, %v1001
        %vm1003 = vcmp.eq.s32.totalorder %v493, %v1002
        %vm1004 = vcmp.eq.s32.totalorder %v494, %v1002
        %v1005 = vsel %vm1003, 1.0, 0.0
        %v1006 = vsel %vm1004, 1.0, 0.0
        %1007 = vmatprep.subr.mxu0 0.0
        %1008 = vmatpush1.msra.mxu0 0.0
        %1009 = vmatprep.subr.mxu0 0.0
        %1010 = vmatpush1.msra.mxu0 0.0
        %1011 = vmatprep.subr.mxu0 0.0
        %1012 = vmatpush1.msra.mxu0 0.0
        %1013 = vmatprep.subr.mxu0 0.0
        %1014 = vmatpush1.msra.mxu0 0.0
        %1015 = vmatprep.subr.mxu0 0.0
        %1016 = vmatpush1.msra.mxu0 0.0
        %1017 = vmatprep.subr.mxu0 0.0
        %1018 = vmatpush1.msra.mxu0 0.0
        %1019 = vmatprep.subr.mxu0 0.0
        %1020 = vmatpush1.msra.mxu0 0.0
        %1021 = vmatprep.subr.mxu0 0.0
        %1022 = vmatpush1.msra.mxu0 0.0
        %1023 = vmatprep.subr.mxu0 0.0
        %1024 = vmatpush1.msra.mxu0 0.0
        %1025 = vmatprep.subr.mxu0 0.0
        %1026 = vmatpush1.msra.mxu0 0.0
        %1027 = vmatprep.subr.mxu0 0.0
        %1028 = vmatpush1.msra.mxu0 0.0
        %1029 = vmatprep.subr.mxu0 0.0
        %1030 = vmatpush1.msra.mxu0 0.0
        %1031 = vmatprep.subr.mxu0 0.0
        %1032 = vmatpush1.msra.mxu0 0.0
        %1033 = vmatprep.subr.mxu0 0.0
        %1034 = vmatpush1.msra.mxu0 0.0
        %1035 = vmatprep.subr.mxu0 0.0
        %1036 = vmatpush1.msra.mxu0 %v1006
        %1037 = vmatprep.subr.mxu0 0.0
        %1038 = vmatpush1.msra.mxu0 %v1005
        %1039 = vmatprep.subr.mxu0 0.0
        %1040 = vmatpush2.msra.mxu0 0.0
        %1041 = vmatprep.subr.mxu0 0.0
        %1042 = vmatpush2.msra.mxu0 0.0
        %1043 = vmatprep.subr.mxu0 0.0
        %1044 = vmatpush2.msra.mxu0 0.0
        %1045 = vmatprep.subr.mxu0 0.0
        %1046 = vmatpush2.msra.mxu0 0.0
        %1047 = vmatprep.subr.mxu0 0.0
        %1048 = vmatpush2.msra.mxu0 0.0
        %1049 = vmatprep.subr.mxu0 0.0
        %1050 = vmatpush2.msra.mxu0 0.0
        %1051 = vmatprep.subr.mxu0 0.0
        %1052 = vmatpush2.msra.mxu0 0.0
        %1053 = vmatprep.subr.mxu0 0.0
        %1054 = vmatpush2.msra.mxu0 0.0
        %1055 = vmatprep.subr.mxu0 0.0
        %1056 = vmatpush2.msra.mxu0 0.0
        %1057 = vmatprep.subr.mxu0 0.0
        %1058 = vmatpush2.msra.mxu0 0.0
        %1059 = vmatprep.subr.mxu0 0.0
        %1060 = vmatpush2.msra.mxu0 0.0
        %1061 = vmatprep.subr.mxu0 0.0
        %1062 = vmatpush2.msra.mxu0 0.0
        %1063 = vmatprep.subr.mxu0 0.0
        %1064 = vmatpush2.msra.mxu0 0.0
        %1065 = vmatprep.subr.mxu0 0.0
        %1066 = vmatpush2.msra.mxu0 0.0
        %1067 = vmatprep.subr.mxu0 0.0
        %1068 = vmatpush2.msra.mxu0 0.0
        %1069 = vmatprep.subr.mxu0 0.0
        %1070 = vmatpush2.msra.mxu0 0.0
        %1071 = vmatprep.mubr.f32.mxu0 0.0
        %1072 = vmatmul.mubr.f32.gmra.mxu0 %v515
        %v1073 = vpop.f32.mrf.mxu0
        %v1074 = vadd.f32 0.0, %v1073
        %v1075 = vpop.f32.mrf.mxu0
        %1076 = vdwg.mxu0
        %1077 = vmatprep.subr.mxu0 0.0
        %1078 = vmatpush1.msra.mxu0 0.0
        %1079 = vmatprep.subr.mxu0 0.0
        %1080 = vmatpush1.msra.mxu0 0.0
        %1081 = vmatprep.subr.mxu0 0.0
        %1082 = vmatpush1.msra.mxu0 0.0
        %1083 = vmatprep.subr.mxu0 0.0
        %1084 = vmatpush1.msra.mxu0 0.0
        %1085 = vmatprep.subr.mxu0 0.0
        %1086 = vmatpush1.msra.mxu0 0.0
        %1087 = vmatprep.subr.mxu0 0.0
        %1088 = vmatpush1.msra.mxu0 0.0
        %1089 = vmatprep.subr.mxu0 0.0
        %1090 = vmatpush1.msra.mxu0 0.0
        %1091 = vmatprep.subr.mxu0 0.0
        %1092 = vmatpush1.msra.mxu0 0.0
        %1093 = vmatprep.subr.mxu0 0.0
        %1094 = vmatpush1.msra.mxu0 0.0
        %1095 = vmatprep.subr.mxu0 0.0
        %1096 = vmatpush1.msra.mxu0 0.0
        %1097 = vmatprep.subr.mxu0 0.0
        %1098 = vmatpush1.msra.mxu0 0.0
        %1099 = vmatprep.subr.mxu0 0.0
        %1100 = vmatpush1.msra.mxu0 0.0
        %1101 = vmatprep.subr.mxu0 0.0
        %1102 = vmatpush1.msra.mxu0 0.0
        %1103 = vmatprep.subr.mxu0 0.0
        %1104 = vmatpush1.msra.mxu0 0.0
        %1105 = vmatprep.subr.mxu0 0.0
        %1106 = vmatpush1.msra.mxu0 %v998
        %1107 = vmatprep.subr.mxu0 0.0
        %1108 = vmatpush1.msra.mxu0 %v997
        %1109 = vmatprep.subr.mxu0 0.0
        %1110 = vmatpush2.msra.mxu0 0.0
        %1111 = vmatprep.subr.mxu0 0.0
        %1112 = vmatpush2.msra.mxu0 0.0
        %1113 = vmatprep.subr.mxu0 0.0
        %1114 = vmatpush2.msra.mxu0 0.0
        %1115 = vmatprep.subr.mxu0 0.0
        %1116 = vmatpush2.msra.mxu0 0.0
        %1117 = vmatprep.subr.mxu0 0.0
        %1118 = vmatpush2.msra.mxu0 0.0
        %1119 = vmatprep.subr.mxu0 0.0
        %1120 = vmatpush2.msra.mxu0 0.0
        %1121 = vmatprep.subr.mxu0 0.0
        %1122 = vmatpush2.msra.mxu0 0.0
        %1123 = vmatprep.subr.mxu0 0.0
        %1124 = vmatpush2.msra.mxu0 0.0
        %1125 = vmatprep.subr.mxu0 0.0
        %1126 = vmatpush2.msra.mxu0 0.0
        %1127 = vmatprep.subr.mxu0 0.0
        %1128 = vmatpush2.msra.mxu0 0.0
        %1129 = vmatprep.subr.mxu0 0.0
        %1130 = vmatpush2.msra.mxu0 0.0
        %1131 = vmatprep.subr.mxu0 0.0
        %1132 = vmatpush2.msra.mxu0 0.0
        %1133 = vmatprep.subr.mxu0 0.0
        %1134 = vmatpush2.msra.mxu0 0.0
        %1135 = vmatprep.subr.mxu0 0.0
        %1136 = vmatpush2.msra.mxu0 0.0
        %1137 = vmatprep.subr.mxu0 0.0
        %1138 = vmatpush2.msra.mxu0 0.0
        %1139 = vmatprep.subr.mxu0 0.0
        %1140 = vmatpush2.msra.mxu0 0.0
        %1141 = vmatprep.mubr.f32.mxu0 0.0
        %1142 = vmatmul.mubr.f32.gmra.mxu0 %v588
        %v1143 = vpop.f32.mrf.mxu0
        %v1144 = vadd.f32 %v1074, %v1143
        %v1145 = vpop.f32.mrf.mxu0
        %1146 = vdwg.mxu0
        %v1147 = vadd.f32 %v1144, %v663
        %v1148 = vmax.f32 %v1147, 0.0
        %v1149 = vmax.f32 %v988, %v1148
        %v1150 = vld [vmem:[%s329 + $0x4] sm:$0x1]
        %v1151 = vld [vmem:[%s336 + $0x4] sm:$0x1]
        %v1152 = vlaneseq
        %v1153 = vshrl.u32 %v1152, 7
        %v1154 = vsub.s32 0, %v1153
        %v1155 = vrot.slane %v1150, %v1154
        %vm1156 = vcmp.eq.s32.totalorder %v493, %v1155
        %vm1157 = vcmp.eq.s32.totalorder %v494, %v1155
        %v1158 = vsel %vm1156, 1.0, 0.0
        %v1159 = vsel %vm1157, 1.0, 0.0
        %v1160 = vlaneseq
        %v1161 = vshrl.u32 %v1160, 7
        %v1162 = vsub.s32 0, %v1161
        %v1163 = vrot.slane %v1151, %v1162
        %vm1164 = vcmp.eq.s32.totalorder %v493, %v1163
        %vm1165 = vcmp.eq.s32.totalorder %v494, %v1163
        %v1166 = vsel %vm1164, 1.0, 0.0
        %v1167 = vsel %vm1165, 1.0, 0.0
        %1168 = vmatprep.subr.mxu0 0.0
        %1169 = vmatpush1.msra.mxu0 0.0
        %1170 = vmatprep.subr.mxu0 0.0
        %1171 = vmatpush1.msra.mxu0 0.0
        %1172 = vmatprep.subr.mxu0 0.0
        %1173 = vmatpush1.msra.mxu0 0.0
        %1174 = vmatprep.subr.mxu0 0.0
        %1175 = vmatpush1.msra.mxu0 0.0
        %1176 = vmatprep.subr.mxu0 0.0
        %1177 = vmatpush1.msra.mxu0 0.0
        %1178 = vmatprep.subr.mxu0 0.0
        %1179 = vmatpush1.msra.mxu0 0.0
        %1180 = vmatprep.subr.mxu0 0.0
        %1181 = vmatpush1.msra.mxu0 0.0
        %1182 = vmatprep.subr.mxu0 0.0
        %1183 = vmatpush1.msra.mxu0 0.0
        %1184 = vmatprep.subr.mxu0 0.0
        %1185 = vmatpush1.msra.mxu0 0.0
        %1186 = vmatprep.subr.mxu0 0.0
        %1187 = vmatpush1.msra.mxu0 0.0
        %1188 = vmatprep.subr.mxu0 0.0
        %1189 = vmatpush1.msra.mxu0 0.0
        %1190 = vmatprep.subr.mxu0 0.0
        %1191 = vmatpush1.msra.mxu0 0.0
        %1192 = vmatprep.subr.mxu0 0.0
        %1193 = vmatpush1.msra.mxu0 0.0
        %1194 = vmatprep.subr.mxu0 0.0
        %1195 = vmatpush1.msra.mxu0 0.0
        %1196 = vmatprep.subr.mxu0 0.0
        %1197 = vmatpush1.msra.mxu0 %v1167
        %1198 = vmatprep.subr.mxu0 0.0
        %1199 = vmatpush1.msra.mxu0 %v1166
        %1200 = vmatprep.subr.mxu0 0.0
        %1201 = vmatpush2.msra.mxu0 0.0
        %1202 = vmatprep.subr.mxu0 0.0
        %1203 = vmatpush2.msra.mxu0 0.0
        %1204 = vmatprep.subr.mxu0 0.0
        %1205 = vmatpush2.msra.mxu0 0.0
        %1206 = vmatprep.subr.mxu0 0.0
        %1207 = vmatpush2.msra.mxu0 0.0
        %1208 = vmatprep.subr.mxu0 0.0
        %1209 = vmatpush2.msra.mxu0 0.0
        %1210 = vmatprep.subr.mxu0 0.0
        %1211 = vmatpush2.msra.mxu0 0.0
        %1212 = vmatprep.subr.mxu0 0.0
        %1213 = vmatpush2.msra.mxu0 0.0
        %1214 = vmatprep.subr.mxu0 0.0
        %1215 = vmatpush2.msra.mxu0 0.0
        %1216 = vmatprep.subr.mxu0 0.0
        %1217 = vmatpush2.msra.mxu0 0.0
        %1218 = vmatprep.subr.mxu0 0.0
        %1219 = vmatpush2.msra.mxu0 0.0
        %1220 = vmatprep.subr.mxu0 0.0
        %1221 = vmatpush2.msra.mxu0 0.0
        %1222 = vmatprep.subr.mxu0 0.0
        %1223 = vmatpush2.msra.mxu0 0.0
        %1224 = vmatprep.subr.mxu0 0.0
        %1225 = vmatpush2.msra.mxu0 0.0
        %1226 = vmatprep.subr.mxu0 0.0
        %1227 = vmatpush2.msra.mxu0 0.0
        %1228 = vmatprep.subr.mxu0 0.0
        %1229 = vmatpush2.msra.mxu0 0.0
        %1230 = vmatprep.subr.mxu0 0.0
        %1231 = vmatpush2.msra.mxu0 0.0
        %1232 = vmatprep.mubr.f32.mxu0 0.0
        %1233 = vmatmul.mubr.f32.gmra.mxu0 %v515
        %v1234 = vpop.f32.mrf.mxu0
        %v1235 = vadd.f32 0.0, %v1234
        %v1236 = vpop.f32.mrf.mxu0
        %1237 = vdwg.mxu0
        %1238 = vmatprep.subr.mxu0 0.0
        %1239 = vmatpush1.msra.mxu0 0.0
        %1240 = vmatprep.subr.mxu0 0.0
        %1241 = vmatpush1.msra.mxu0 0.0
        %1242 = vmatprep.subr.mxu0 0.0
        %1243 = vmatpush1.msra.mxu0 0.0
        %1244 = vmatprep.subr.mxu0 0.0
        %1245 = vmatpush1.msra.mxu0 0.0
        %1246 = vmatprep.subr.mxu0 0.0
        %1247 = vmatpush1.msra.mxu0 0.0
        %1248 = vmatprep.subr.mxu0 0.0
        %1249 = vmatpush1.msra.mxu0 0.0
        %1250 = vmatprep.subr.mxu0 0.0
        %1251 = vmatpush1.msra.mxu0 0.0
        %1252 = vmatprep.subr.mxu0 0.0
        %1253 = vmatpush1.msra.mxu0 0.0
        %1254 = vmatprep.subr.mxu0 0.0
        %1255 = vmatpush1.msra.mxu0 0.0
        %1256 = vmatprep.subr.mxu0 0.0
        %1257 = vmatpush1.msra.mxu0 0.0
        %1258 = vmatprep.subr.mxu0 0.0
        %1259 = vmatpush1.msra.mxu0 0.0
        %1260 = vmatprep.subr.mxu0 0.0
        %1261 = vmatpush1.msra.mxu0 0.0
        %1262 = vmatprep.subr.mxu0 0.0
        %1263 = vmatpush1.msra.mxu0 0.0
        %1264 = vmatprep.subr.mxu0 0.0
        %1265 = vmatpush1.msra.mxu0 0.0
        %1266 = vmatprep.subr.mxu0 0.0
        %1267 = vmatpush1.msra.mxu0 %v1159
        %1268 = vmatprep.subr.mxu0 0.0
        %1269 = vmatpush1.msra.mxu0 %v1158
        %1270 = vmatprep.subr.mxu0 0.0
        %1271 = vmatpush2.msra.mxu0 0.0
        %1272 = vmatprep.subr.mxu0 0.0
        %1273 = vmatpush2.msra.mxu0 0.0
        %1274 = vmatprep.subr.mxu0 0.0
        %1275 = vmatpush2.msra.mxu0 0.0
        %1276 = vmatprep.subr.mxu0 0.0
        %1277 = vmatpush2.msra.mxu0 0.0
        %1278 = vmatprep.subr.mxu0 0.0
        %1279 = vmatpush2.msra.mxu0 0.0
        %1280 = vmatprep.subr.mxu0 0.0
        %1281 = vmatpush2.msra.mxu0 0.0
        %1282 = vmatprep.subr.mxu0 0.0
        %1283 = vmatpush2.msra.mxu0 0.0
        %1284 = vmatprep.subr.mxu0 0.0
        %1285 = vmatpush2.msra.mxu0 0.0
        %1286 = vmatprep.subr.mxu0 0.0
        %1287 = vmatpush2.msra.mxu0 0.0
        %1288 = vmatprep.subr.mxu0 0.0
        %1289 = vmatpush2.msra.mxu0 0.0
        %1290 = vmatprep.subr.mxu0 0.0
        %1291 = vmatpush2.msra.mxu0 0.0
        %1292 = vmatprep.subr.mxu0 0.0
        %1293 = vmatpush2.msra.mxu0 0.0
        %1294 = vmatprep.subr.mxu0 0.0
        %1295 = vmatpush2.msra.mxu0 0.0
        %1296 = vmatprep.subr.mxu0 0.0
        %1297 = vmatpush2.msra.mxu0 0.0
        %1298 = vmatprep.subr.mxu0 0.0
        %1299 = vmatpush2.msra.mxu0 0.0
        %1300 = vmatprep.subr.mxu0 0.0
        %1301 = vmatpush2.msra.mxu0 0.0
        %1302 = vmatprep.mubr.f32.mxu0 0.0
        %1303 = vmatmul.mubr.f32.gmra.mxu0 %v588
        %v1304 = vpop.f32.mrf.mxu0
        %v1305 = vadd.f32 %v1235, %v1304
        %v1306 = vpop.f32.mrf.mxu0
        %1307 = vdwg.mxu0
        %v1308 = vadd.f32 %v1305, %v663
        %v1309 = vmax.f32 %v1308, 0.0
        %v1310 = vmax.f32 %v1149, %v1309
        %v1311 = vld [vmem:[%s329 + $0x5] sm:$0x1]
        %v1312 = vld [vmem:[%s336 + $0x5] sm:$0x1]
        %v1313 = vlaneseq
        %v1314 = vshrl.u32 %v1313, 7
        %v1315 = vsub.s32 0, %v1314
        %v1316 = vrot.slane %v1311, %v1315
        %vm1317 = vcmp.eq.s32.totalorder %v493, %v1316
        %vm1318 = vcmp.eq.s32.totalorder %v494, %v1316
        %v1319 = vsel %vm1317, 1.0, 0.0
        %v1320 = vsel %vm1318, 1.0, 0.0
        %v1321 = vlaneseq
        %v1322 = vshrl.u32 %v1321, 7
        %v1323 = vsub.s32 0, %v1322
        %v1324 = vrot.slane %v1312, %v1323
        %vm1325 = vcmp.eq.s32.totalorder %v493, %v1324
        %vm1326 = vcmp.eq.s32.totalorder %v494, %v1324
        %v1327 = vsel %vm1325, 1.0, 0.0
        %v1328 = vsel %vm1326, 1.0, 0.0
        %1329 = vmatprep.subr.mxu0 0.0
        %1330 = vmatpush1.msra.mxu0 0.0
        %1331 = vmatprep.subr.mxu0 0.0
        %1332 = vmatpush1.msra.mxu0 0.0
        %1333 = vmatprep.subr.mxu0 0.0
        %1334 = vmatpush1.msra.mxu0 0.0
        %1335 = vmatprep.subr.mxu0 0.0
        %1336 = vmatpush1.msra.mxu0 0.0
        %1337 = vmatprep.subr.mxu0 0.0
        %1338 = vmatpush1.msra.mxu0 0.0
        %1339 = vmatprep.subr.mxu0 0.0
        %1340 = vmatpush1.msra.mxu0 0.0
        %1341 = vmatprep.subr.mxu0 0.0
        %1342 = vmatpush1.msra.mxu0 0.0
        %1343 = vmatprep.subr.mxu0 0.0
        %1344 = vmatpush1.msra.mxu0 0.0
        %1345 = vmatprep.subr.mxu0 0.0
        %1346 = vmatpush1.msra.mxu0 0.0
        %1347 = vmatprep.subr.mxu0 0.0
        %1348 = vmatpush1.msra.mxu0 0.0
        %1349 = vmatprep.subr.mxu0 0.0
        %1350 = vmatpush1.msra.mxu0 0.0
        %1351 = vmatprep.subr.mxu0 0.0
        %1352 = vmatpush1.msra.mxu0 0.0
        %1353 = vmatprep.subr.mxu0 0.0
        %1354 = vmatpush1.msra.mxu0 0.0
        %1355 = vmatprep.subr.mxu0 0.0
        %1356 = vmatpush1.msra.mxu0 0.0
        %1357 = vmatprep.subr.mxu0 0.0
        %1358 = vmatpush1.msra.mxu0 %v1328
        %1359 = vmatprep.subr.mxu0 0.0
        %1360 = vmatpush1.msra.mxu0 %v1327
        %1361 = vmatprep.subr.mxu0 0.0
        %1362 = vmatpush2.msra.mxu0 0.0
        %1363 = vmatprep.subr.mxu0 0.0
        %1364 = vmatpush2.msra.mxu0 0.0
        %1365 = vmatprep.subr.mxu0 0.0
        %1366 = vmatpush2.msra.mxu0 0.0
        %1367 = vmatprep.subr.mxu0 0.0
        %1368 = vmatpush2.msra.mxu0 0.0
        %1369 = vmatprep.subr.mxu0 0.0
        %1370 = vmatpush2.msra.mxu0 0.0
        %1371 = vmatprep.subr.mxu0 0.0
        %1372 = vmatpush2.msra.mxu0 0.0
        %1373 = vmatprep.subr.mxu0 0.0
        %1374 = vmatpush2.msra.mxu0 0.0
        %1375 = vmatprep.subr.mxu0 0.0
        %1376 = vmatpush2.msra.mxu0 0.0
        %1377 = vmatprep.subr.mxu0 0.0
        %1378 = vmatpush2.msra.mxu0 0.0
        %1379 = vmatprep.subr.mxu0 0.0
        %1380 = vmatpush2.msra.mxu0 0.0
        %1381 = vmatprep.subr.mxu0 0.0
        %1382 = vmatpush2.msra.mxu0 0.0
        %1383 = vmatprep.subr.mxu0 0.0
        %1384 = vmatpush2.msra.mxu0 0.0
        %1385 = vmatprep.subr.mxu0 0.0
        %1386 = vmatpush2.msra.mxu0 0.0
        %1387 = vmatprep.subr.mxu0 0.0
        %1388 = vmatpush2.msra.mxu0 0.0
        %1389 = vmatprep.subr.mxu0 0.0
        %1390 = vmatpush2.msra.mxu0 0.0
        %1391 = vmatprep.subr.mxu0 0.0
        %1392 = vmatpush2.msra.mxu0 0.0
        %1393 = vmatprep.mubr.f32.mxu0 0.0
        %1394 = vmatmul.mubr.f32.gmra.mxu0 %v515
        %v1395 = vpop.f32.mrf.mxu0
        %v1396 = vadd.f32 0.0, %v1395
        %v1397 = vpop.f32.mrf.mxu0
        %1398 = vdwg.mxu0
        %1399 = vmatprep.subr.mxu0 0.0
        %1400 = vmatpush1.msra.mxu0 0.0
        %1401 = vmatprep.subr.mxu0 0.0
        %1402 = vmatpush1.msra.mxu0 0.0
        %1403 = vmatprep.subr.mxu0 0.0
        %1404 = vmatpush1.msra.mxu0 0.0
        %1405 = vmatprep.subr.mxu0 0.0
        %1406 = vmatpush1.msra.mxu0 0.0
        %1407 = vmatprep.subr.mxu0 0.0
        %1408 = vmatpush1.msra.mxu0 0.0
        %1409 = vmatprep.subr.mxu0 0.0
        %1410 = vmatpush1.msra.mxu0 0.0
        %1411 = vmatprep.subr.mxu0 0.0
        %1412 = vmatpush1.msra.mxu0 0.0
        %1413 = vmatprep.subr.mxu0 0.0
        %1414 = vmatpush1.msra.mxu0 0.0
        %1415 = vmatprep.subr.mxu0 0.0
        %1416 = vmatpush1.msra.mxu0 0.0
        %1417 = vmatprep.subr.mxu0 0.0
        %1418 = vmatpush1.msra.mxu0 0.0
        %1419 = vmatprep.subr.mxu0 0.0
        %1420 = vmatpush1.msra.mxu0 0.0
        %1421 = vmatprep.subr.mxu0 0.0
        %1422 = vmatpush1.msra.mxu0 0.0
        %1423 = vmatprep.subr.mxu0 0.0
        %1424 = vmatpush1.msra.mxu0 0.0
        %1425 = vmatprep.subr.mxu0 0.0
        %1426 = vmatpush1.msra.mxu0 0.0
        %1427 = vmatprep.subr.mxu0 0.0
        %1428 = vmatpush1.msra.mxu0 %v1320
        %1429 = vmatprep.subr.mxu0 0.0
        %1430 = vmatpush1.msra.mxu0 %v1319
        %1431 = vmatprep.subr.mxu0 0.0
        %1432 = vmatpush2.msra.mxu0 0.0
        %1433 = vmatprep.subr.mxu0 0.0
        %1434 = vmatpush2.msra.mxu0 0.0
        %1435 = vmatprep.subr.mxu0 0.0
        %1436 = vmatpush2.msra.mxu0 0.0
        %1437 = vmatprep.subr.mxu0 0.0
        %1438 = vmatpush2.msra.mxu0 0.0
        %1439 = vmatprep.subr.mxu0 0.0
        %1440 = vmatpush2.msra.mxu0 0.0
        %1441 = vmatprep.subr.mxu0 0.0
        %1442 = vmatpush2.msra.mxu0 0.0
        %1443 = vmatprep.subr.mxu0 0.0
        %1444 = vmatpush2.msra.mxu0 0.0
        %1445 = vmatprep.subr.mxu0 0.0
        %1446 = vmatpush2.msra.mxu0 0.0
        %1447 = vmatprep.subr.mxu0 0.0
        %1448 = vmatpush2.msra.mxu0 0.0
        %1449 = vmatprep.subr.mxu0 0.0
        %1450 = vmatpush2.msra.mxu0 0.0
        %1451 = vmatprep.subr.mxu0 0.0
        %1452 = vmatpush2.msra.mxu0 0.0
        %1453 = vmatprep.subr.mxu0 0.0
        %1454 = vmatpush2.msra.mxu0 0.0
        %1455 = vmatprep.subr.mxu0 0.0
        %1456 = vmatpush2.msra.mxu0 0.0
        %1457 = vmatprep.subr.mxu0 0.0
        %1458 = vmatpush2.msra.mxu0 0.0
        %1459 = vmatprep.subr.mxu0 0.0
        %1460 = vmatpush2.msra.mxu0 0.0
        %1461 = vmatprep.subr.mxu0 0.0
        %1462 = vmatpush2.msra.mxu0 0.0
        %1463 = vmatprep.mubr.f32.mxu0 0.0
        %1464 = vmatmul.mubr.f32.gmra.mxu0 %v588
        %v1465 = vpop.f32.mrf.mxu0
        %v1466 = vadd.f32 %v1396, %v1465
        %v1467 = vpop.f32.mrf.mxu0
        %1468 = vdwg.mxu0
        %v1469 = vadd.f32 %v1466, %v663
        %v1470 = vmax.f32 %v1469, 0.0
        %v1471 = vmax.f32 %v1310, %v1470
        %v1472 = vld [vmem:[%s329 + $0x6] sm:$0x1]
        %v1473 = vld [vmem:[%s336 + $0x6] sm:$0x1]
        %v1474 = vlaneseq
        %v1475 = vshrl.u32 %v1474, 7
        %v1476 = vsub.s32 0, %v1475
        %v1477 = vrot.slane %v1472, %v1476
        %vm1478 = vcmp.eq.s32.totalorder %v493, %v1477
        %vm1479 = vcmp.eq.s32.totalorder %v494, %v1477
        %v1480 = vsel %vm1478, 1.0, 0.0
        %v1481 = vsel %vm1479, 1.0, 0.0
        %v1482 = vlaneseq
        %v1483 = vshrl.u32 %v1482, 7
        %v1484 = vsub.s32 0, %v1483
        %v1485 = vrot.slane %v1473, %v1484
        %vm1486 = vcmp.eq.s32.totalorder %v493, %v1485
        %vm1487 = vcmp.eq.s32.totalorder %v494, %v1485
        %v1488 = vsel %vm1486, 1.0, 0.0
        %v1489 = vsel %vm1487, 1.0, 0.0
        %1490 = vmatprep.subr.mxu0 0.0
        %1491 = vmatpush1.msra.mxu0 0.0
        %1492 = vmatprep.subr.mxu0 0.0
        %1493 = vmatpush1.msra.mxu0 0.0
        %1494 = vmatprep.subr.mxu0 0.0
        %1495 = vmatpush1.msra.mxu0 0.0
        %1496 = vmatprep.subr.mxu0 0.0
        %1497 = vmatpush1.msra.mxu0 0.0
        %1498 = vmatprep.subr.mxu0 0.0
        %1499 = vmatpush1.msra.mxu0 0.0
        %1500 = vmatprep.subr.mxu0 0.0
        %1501 = vmatpush1.msra.mxu0 0.0
        %1502 = vmatprep.subr.mxu0 0.0
        %1503 = vmatpush1.msra.mxu0 0.0
        %1504 = vmatprep.subr.mxu0 0.0
        %1505 = vmatpush1.msra.mxu0 0.0
        %1506 = vmatprep.subr.mxu0 0.0
        %1507 = vmatpush1.msra.mxu0 0.0
        %1508 = vmatprep.subr.mxu0 0.0
        %1509 = vmatpush1.msra.mxu0 0.0
        %1510 = vmatprep.subr.mxu0 0.0
        %1511 = vmatpush1.msra.mxu0 0.0
        %1512 = vmatprep.subr.mxu0 0.0
        %1513 = vmatpush1.msra.mxu0 0.0
        %1514 = vmatprep.subr.mxu0 0.0
        %1515 = vmatpush1.msra.mxu0 0.0
        %1516 = vmatprep.subr.mxu0 0.0
        %1517 = vmatpush1.msra.mxu0 0.0
        %1518 = vmatprep.subr.mxu0 0.0
        %1519 = vmatpush1.msra.mxu0 %v1489
        %1520 = vmatprep.subr.mxu0 0.0
        %1521 = vmatpush1.msra.mxu0 %v1488
        %1522 = vmatprep.subr.mxu0 0.0
        %1523 = vmatpush2.msra.mxu0 0.0
        %1524 = vmatprep.subr.mxu0 0.0
        %1525 = vmatpush2.msra.mxu0 0.0
        %1526 = vmatprep.subr.mxu0 0.0
        %1527 = vmatpush2.msra.mxu0 0.0
        %1528 = vmatprep.subr.mxu0 0.0
        %1529 = vmatpush2.msra.mxu0 0.0
        %1530 = vmatprep.subr.mxu0 0.0
        %1531 = vmatpush2.msra.mxu0 0.0
        %1532 = vmatprep.subr.mxu0 0.0
        %1533 = vmatpush2.msra.mxu0 0.0
        %1534 = vmatprep.subr.mxu0 0.0
        %1535 = vmatpush2.msra.mxu0 0.0
        %1536 = vmatprep.subr.mxu0 0.0
        %1537 = vmatpush2.msra.mxu0 0.0
        %1538 = vmatprep.subr.mxu0 0.0
        %1539 = vmatpush2.msra.mxu0 0.0
        %1540 = vmatprep.subr.mxu0 0.0
        %1541 = vmatpush2.msra.mxu0 0.0
        %1542 = vmatprep.subr.mxu0 0.0
        %1543 = vmatpush2.msra.mxu0 0.0
        %1544 = vmatprep.subr.mxu0 0.0
        %1545 = vmatpush2.msra.mxu0 0.0
        %1546 = vmatprep.subr.mxu0 0.0
        %1547 = vmatpush2.msra.mxu0 0.0
        %1548 = vmatprep.subr.mxu0 0.0
        %1549 = vmatpush2.msra.mxu0 0.0
        %1550 = vmatprep.subr.mxu0 0.0
        %1551 = vmatpush2.msra.mxu0 0.0
        %1552 = vmatprep.subr.mxu0 0.0
        %1553 = vmatpush2.msra.mxu0 0.0
        %1554 = vmatprep.mubr.f32.mxu0 0.0
        %1555 = vmatmul.mubr.f32.gmra.mxu0 %v515
        %v1556 = vpop.f32.mrf.mxu0
        %v1557 = vadd.f32 0.0, %v1556
        %v1558 = vpop.f32.mrf.mxu0
        %1559 = vdwg.mxu0
        %1560 = vmatprep.subr.mxu0 0.0
        %1561 = vmatpush1.msra.mxu0 0.0
        %1562 = vmatprep.subr.mxu0 0.0
        %1563 = vmatpush1.msra.mxu0 0.0
        %1564 = vmatprep.subr.mxu0 0.0
        %1565 = vmatpush1.msra.mxu0 0.0
        %1566 = vmatprep.subr.mxu0 0.0
        %1567 = vmatpush1.msra.mxu0 0.0
        %1568 = vmatprep.subr.mxu0 0.0
        %1569 = vmatpush1.msra.mxu0 0.0
        %1570 = vmatprep.subr.mxu0 0.0
        %1571 = vmatpush1.msra.mxu0 0.0
        %1572 = vmatprep.subr.mxu0 0.0
        %1573 = vmatpush1.msra.mxu0 0.0
        %1574 = vmatprep.subr.mxu0 0.0
        %1575 = vmatpush1.msra.mxu0 0.0
        %1576 = vmatprep.subr.mxu0 0.0
        %1577 = vmatpush1.msra.mxu0 0.0
        %1578 = vmatprep.subr.mxu0 0.0
        %1579 = vmatpush1.msra.mxu0 0.0
        %1580 = vmatprep.subr.mxu0 0.0
        %1581 = vmatpush1.msra.mxu0 0.0
        %1582 = vmatprep.subr.mxu0 0.0
        %1583 = vmatpush1.msra.mxu0 0.0
        %1584 = vmatprep.subr.mxu0 0.0
        %1585 = vmatpush1.msra.mxu0 0.0
        %1586 = vmatprep.subr.mxu0 0.0
        %1587 = vmatpush1.msra.mxu0 0.0
        %1588 = vmatprep.subr.mxu0 0.0
        %1589 = vmatpush1.msra.mxu0 %v1481
        %1590 = vmatprep.subr.mxu0 0.0
        %1591 = vmatpush1.msra.mxu0 %v1480
        %1592 = vmatprep.subr.mxu0 0.0
        %1593 = vmatpush2.msra.mxu0 0.0
        %1594 = vmatprep.subr.mxu0 0.0
        %1595 = vmatpush2.msra.mxu0 0.0
        %1596 = vmatprep.subr.mxu0 0.0
        %1597 = vmatpush2.msra.mxu0 0.0
        %1598 = vmatprep.subr.mxu0 0.0
        %1599 = vmatpush2.msra.mxu0 0.0
        %1600 = vmatprep.subr.mxu0 0.0
        %1601 = vmatpush2.msra.mxu0 0.0
        %1602 = vmatprep.subr.mxu0 0.0
        %1603 = vmatpush2.msra.mxu0 0.0
        %1604 = vmatprep.subr.mxu0 0.0
        %1605 = vmatpush2.msra.mxu0 0.0
        %1606 = vmatprep.subr.mxu0 0.0
        %1607 = vmatpush2.msra.mxu0 0.0
        %1608 = vmatprep.subr.mxu0 0.0
        %1609 = vmatpush2.msra.mxu0 0.0
        %1610 = vmatprep.subr.mxu0 0.0
        %1611 = vmatpush2.msra.mxu0 0.0
        %1612 = vmatprep.subr.mxu0 0.0
        %1613 = vmatpush2.msra.mxu0 0.0
        %1614 = vmatprep.subr.mxu0 0.0
        %1615 = vmatpush2.msra.mxu0 0.0
        %1616 = vmatprep.subr.mxu0 0.0
        %1617 = vmatpush2.msra.mxu0 0.0
        %1618 = vmatprep.subr.mxu0 0.0
        %1619 = vmatpush2.msra.mxu0 0.0
        %1620 = vmatprep.subr.mxu0 0.0
        %1621 = vmatpush2.msra.mxu0 0.0
        %1622 = vmatprep.subr.mxu0 0.0
        %1623 = vmatpush2.msra.mxu0 0.0
        %1624 = vmatprep.mubr.f32.mxu0 0.0
        %1625 = vmatmul.mubr.f32.gmra.mxu0 %v588
        %v1626 = vpop.f32.mrf.mxu0
        %v1627 = vadd.f32 %v1557, %v1626
        %v1628 = vpop.f32.mrf.mxu0
        %1629 = vdwg.mxu0
        %v1630 = vadd.f32 %v1627, %v663
        %v1631 = vmax.f32 %v1630, 0.0
        %v1632 = vmax.f32 %v1471, %v1631
        %v1633 = vld [vmem:[%s329 + $0x7] sm:$0x1]
        %v1634 = vld [vmem:[%s336 + $0x7] sm:$0x1]
        %v1635 = vlaneseq
        %v1636 = vshrl.u32 %v1635, 7
        %v1637 = vsub.s32 0, %v1636
        %v1638 = vrot.slane %v1633, %v1637
        %vm1639 = vcmp.eq.s32.totalorder %v493, %v1638
        %vm1640 = vcmp.eq.s32.totalorder %v494, %v1638
        %v1641 = vsel %vm1639, 1.0, 0.0
        %v1642 = vsel %vm1640, 1.0, 0.0
        %v1643 = vlaneseq
        %v1644 = vshrl.u32 %v1643, 7
        %v1645 = vsub.s32 0, %v1644
        %v1646 = vrot.slane %v1634, %v1645
        %vm1647 = vcmp.eq.s32.totalorder %v493, %v1646
        %vm1648 = vcmp.eq.s32.totalorder %v494, %v1646
        %v1649 = vsel %vm1647, 1.0, 0.0
        %v1650 = vsel %vm1648, 1.0, 0.0
        %1651 = vmatprep.subr.mxu0 0.0
        %1652 = vmatpush1.msra.mxu0 0.0
        %1653 = vmatprep.subr.mxu0 0.0
        %1654 = vmatpush1.msra.mxu0 0.0
        %1655 = vmatprep.subr.mxu0 0.0
        %1656 = vmatpush1.msra.mxu0 0.0
        %1657 = vmatprep.subr.mxu0 0.0
        %1658 = vmatpush1.msra.mxu0 0.0
        %1659 = vmatprep.subr.mxu0 0.0
        %1660 = vmatpush1.msra.mxu0 0.0
        %1661 = vmatprep.subr.mxu0 0.0
        %1662 = vmatpush1.msra.mxu0 0.0
        %1663 = vmatprep.subr.mxu0 0.0
        %1664 = vmatpush1.msra.mxu0 0.0
        %1665 = vmatprep.subr.mxu0 0.0
        %1666 = vmatpush1.msra.mxu0 0.0
        %1667 = vmatprep.subr.mxu0 0.0
        %1668 = vmatpush1.msra.mxu0 0.0
        %1669 = vmatprep.subr.mxu0 0.0
        %1670 = vmatpush1.msra.mxu0 0.0
        %1671 = vmatprep.subr.mxu0 0.0
        %1672 = vmatpush1.msra.mxu0 0.0
        %1673 = vmatprep.subr.mxu0 0.0
        %1674 = vmatpush1.msra.mxu0 0.0
        %1675 = vmatprep.subr.mxu0 0.0
        %1676 = vmatpush1.msra.mxu0 0.0
        %1677 = vmatprep.subr.mxu0 0.0
        %1678 = vmatpush1.msra.mxu0 0.0
        %1679 = vmatprep.subr.mxu0 0.0
        %1680 = vmatpush1.msra.mxu0 %v1650
        %1681 = vmatprep.subr.mxu0 0.0
        %1682 = vmatpush1.msra.mxu0 %v1649
        %1683 = vmatprep.subr.mxu0 0.0
        %1684 = vmatpush2.msra.mxu0 0.0
        %1685 = vmatprep.subr.mxu0 0.0
        %1686 = vmatpush2.msra.mxu0 0.0
        %1687 = vmatprep.subr.mxu0 0.0
        %1688 = vmatpush2.msra.mxu0 0.0
        %1689 = vmatprep.subr.mxu0 0.0
        %1690 = vmatpush2.msra.mxu0 0.0
        %1691 = vmatprep.subr.mxu0 0.0
        %1692 = vmatpush2.msra.mxu0 0.0
        %1693 = vmatprep.subr.mxu0 0.0
        %1694 = vmatpush2.msra.mxu0 0.0
        %1695 = vmatprep.subr.mxu0 0.0
        %1696 = vmatpush2.msra.mxu0 0.0
        %1697 = vmatprep.subr.mxu0 0.0
        %1698 = vmatpush2.msra.mxu0 0.0
        %1699 = vmatprep.subr.mxu0 0.0
        %1700 = vmatpush2.msra.mxu0 0.0
        %1701 = vmatprep.subr.mxu0 0.0
        %1702 = vmatpush2.msra.mxu0 0.0
        %1703 = vmatprep.subr.mxu0 0.0
        %1704 = vmatpush2.msra.mxu0 0.0
        %1705 = vmatprep.subr.mxu0 0.0
        %1706 = vmatpush2.msra.mxu0 0.0
        %1707 = vmatprep.subr.mxu0 0.0
        %1708 = vmatpush2.msra.mxu0 0.0
        %1709 = vmatprep.subr.mxu0 0.0
        %1710 = vmatpush2.msra.mxu0 0.0
        %1711 = vmatprep.subr.mxu0 0.0
        %1712 = vmatpush2.msra.mxu0 0.0
        %1713 = vmatprep.subr.mxu0 0.0
        %1714 = vmatpush2.msra.mxu0 0.0
        %1715 = vmatprep.mubr.f32.mxu0 0.0
        %1716 = vmatmul.mubr.f32.gmra.mxu0 %v515
        %v1717 = vpop.f32.mrf.mxu0
        %v1718 = vadd.f32 0.0, %v1717
        %v1719 = vpop.f32.mrf.mxu0
        %1720 = vdwg.mxu0
        %1721 = vmatprep.subr.mxu0 0.0
        %1722 = vmatpush1.msra.mxu0 0.0
        %1723 = vmatprep.subr.mxu0 0.0
        %1724 = vmatpush1.msra.mxu0 0.0
        %1725 = vmatprep.subr.mxu0 0.0
        %1726 = vmatpush1.msra.mxu0 0.0
        %1727 = vmatprep.subr.mxu0 0.0
        %1728 = vmatpush1.msra.mxu0 0.0
        %1729 = vmatprep.subr.mxu0 0.0
        %1730 = vmatpush1.msra.mxu0 0.0
        %1731 = vmatprep.subr.mxu0 0.0
        %1732 = vmatpush1.msra.mxu0 0.0
        %1733 = vmatprep.subr.mxu0 0.0
        %1734 = vmatpush1.msra.mxu0 0.0
        %1735 = vmatprep.subr.mxu0 0.0
        %1736 = vmatpush1.msra.mxu0 0.0
        %1737 = vmatprep.subr.mxu0 0.0
        %1738 = vmatpush1.msra.mxu0 0.0
        %1739 = vmatprep.subr.mxu0 0.0
        %1740 = vmatpush1.msra.mxu0 0.0
        %1741 = vmatprep.subr.mxu0 0.0
        %1742 = vmatpush1.msra.mxu0 0.0
        %1743 = vmatprep.subr.mxu0 0.0
        %1744 = vmatpush1.msra.mxu0 0.0
        %1745 = vmatprep.subr.mxu0 0.0
        %1746 = vmatpush1.msra.mxu0 0.0
        %1747 = vmatprep.subr.mxu0 0.0
        %1748 = vmatpush1.msra.mxu0 0.0
        %1749 = vmatprep.subr.mxu0 0.0
        %1750 = vmatpush1.msra.mxu0 %v1642
        %1751 = vmatprep.subr.mxu0 0.0
        %1752 = vmatpush1.msra.mxu0 %v1641
        %1753 = vmatprep.subr.mxu0 0.0
        %1754 = vmatpush2.msra.mxu0 0.0
        %1755 = vmatprep.subr.mxu0 0.0
        %1756 = vmatpush2.msra.mxu0 0.0
        %1757 = vmatprep.subr.mxu0 0.0
        %1758 = vmatpush2.msra.mxu0 0.0
        %1759 = vmatprep.subr.mxu0 0.0
        %1760 = vmatpush2.msra.mxu0 0.0
        %1761 = vmatprep.subr.mxu0 0.0
        %1762 = vmatpush2.msra.mxu0 0.0
        %1763 = vmatprep.subr.mxu0 0.0
        %1764 = vmatpush2.msra.mxu0 0.0
        %1765 = vmatprep.subr.mxu0 0.0
        %1766 = vmatpush2.msra.mxu0 0.0
        %1767 = vmatprep.subr.mxu0 0.0
        %1768 = vmatpush2.msra.mxu0 0.0
        %1769 = vmatprep.subr.mxu0 0.0
        %1770 = vmatpush2.msra.mxu0 0.0
        %1771 = vmatprep.subr.mxu0 0.0
        %1772 = vmatpush2.msra.mxu0 0.0
        %1773 = vmatprep.subr.mxu0 0.0
        %1774 = vmatpush2.msra.mxu0 0.0
        %1775 = vmatprep.subr.mxu0 0.0
        %1776 = vmatpush2.msra.mxu0 0.0
        %1777 = vmatprep.subr.mxu0 0.0
        %1778 = vmatpush2.msra.mxu0 0.0
        %1779 = vmatprep.subr.mxu0 0.0
        %1780 = vmatpush2.msra.mxu0 0.0
        %1781 = vmatprep.subr.mxu0 0.0
        %1782 = vmatpush2.msra.mxu0 0.0
        %1783 = vmatprep.subr.mxu0 0.0
        %1784 = vmatpush2.msra.mxu0 0.0
        %1785 = vmatprep.mubr.f32.mxu0 0.0
        %1786 = vmatmul.mubr.f32.gmra.mxu0 %v588
        %v1787 = vpop.f32.mrf.mxu0
        %v1788 = vadd.f32 %v1718, %v1787
        %v1789 = vpop.f32.mrf.mxu0
        %1790 = vdwg.mxu0
        %v1791 = vadd.f32 %v1788, %v663
        %v1792 = vmax.f32 %v1791, 0.0
        %v1793 = vmax.f32 %v1632, %v1792
        %1794 = vst.msk [vmem:[%s322] sm:$0xff] %vm513, %v1793
        %s1795 = sand.u32 %s190, 1
        %s1796 = scalar_lea.sflag [#allocation4], %s1795
        %s1797 = sand.u32 %s190, 1
        %s1798 = smul.addr %s1797, 8
        %s1799 = scalar_lea.vmem [#allocation5], %s1798
        // Predicated region
        $region49: #{tpu_custom_call.1} parent=43 // pred_check
          %p1800 = pneg %p200
        $region50: #{tpu_custom_call.1} parent=43 // pred_check_branch
          %1802 = sbr.rel (%p1800) target = $region52
        $region51: #{tpu_custom_call.1} parent=43 // pred_region
          %s1804 = ssub.s32 128, 128
          %1805 = vsyncadd %s1796, %s1804
          %s1806 = sadd.s32 %s28, %s27
          %s1807 = smul.addr %s1806, 128
          %s1808 = scalar_lea.hbm %s6, %s1807
          %s1810 = sshll.u32 %s1799, 4
          %s1811 = int_to_ptr.vmem [resolvable:$true] %s1810
          %1813 = dma.vmem_to_hbm [thread:$0]  %s1811, 128, %s1808, %s1796
        $region52: #{tpu_custom_call.1} parent=43 // pred_fallthru
          _
      $region44: #{tpu_custom_call.1} parent=5 // pred_fallthru
        _
      %p1814 = scmp.le.s32.totalorder 2, %s18
      // Predicated region
      $region53: #{tpu_custom_call.1} parent=5 // pred_check
        %p1815 = pneg %p1814
      $region54: #{tpu_custom_call.1} parent=5 // pred_check_branch
        %1817 = sbr.rel (%p1815) target = $region56
      $region55: #{tpu_custom_call.1} parent=5 // pred_region
        %s1818 = ssub.s32 %s18, 2
        // Predicated region
        $region57: #{tpu_custom_call.1} parent=55 // pred_check
          %p1819 = pneg %p206
        $region58: #{tpu_custom_call.1} parent=55 // pred_check_branch
          %1821 = sbr.rel (%p1819) target = $region60
        $region59: #{tpu_custom_call.1} parent=55 // pred_region
          %s1822 = sand.u32 %s191, 1
          %s1823 = scalar_lea.sflag [#allocation4], %s1822
          %s1824 = sand.u32 %s191, 1
          %s1825 = smul.addr %s1824, 8
          %s1826 = scalar_lea.vmem [#allocation5], %s1825
          %1827 = dma.done %s1823, 128
        $region60: #{tpu_custom_call.1} parent=55 // pred_fallthru
          _
      $region56: #{tpu_custom_call.1} parent=5 // pred_fallthru
        _
    $region6: #{tpu_custom_call.1} parent=1 // loop_footer
      %s22 = sadd.s32 1, %s18
    $region7: #{tpu_custom_call.1} parent=1 // loop_footer_branch
      %17 = sbr.rel target = $region3
    $region8: #{tpu_custom_call.1} parent=1 // loop_exit
      _
    %1828 = vsyncpa [#allocation3], 1
    %s1829 = scalar_lea.sflag [#allocation3], 1
    %1830 = vsyncpa %s1829, 1
    %1831 = vsyncpa [#allocation4], 1
    %s1832 = scalar_lea.sflag [#allocation4], 1
    %1833 = vsyncpa %s1832, 1

</llo_original>
